<compile_context>
chip_gen: v5e
topology: v5e:2x2
jax: 0.10.0
libtpu: 0.0.40
codegen_flags: <defaults>
</compile_context>

<pallas_src>
import functools
import math

import jax
import jax.numpy as jnp
from jax.experimental import pallas as pl
from jax.experimental.pallas import tpu as pltpu

VMEM_SPEC = pl.BlockSpec(memory_space=pltpu.MemorySpace.VMEM)


# ----------------------------------------------------------------------------
# Fused kernel: embedding -> LSTM -> encoder layer -> decoder -> fc -> log_softmax
# ----------------------------------------------------------------------------
def _tfeq_kernel(
    x_ref, emb_w_ref, emb_b_ref,
    wx_ref, wh_ref, lb_ref, pm_ref,
    wqkv_ref, bqkv_ref, wo_ref, bo_ref,
    g1_ref, be1_ref, w1_ref, b1_ref, w2_ref, b2_ref, g2_ref, be2_ref,
    msum_ref, mbc_ref,
    wdec_ref, bdec_ref, fcw_ref, sel_ref, fcb_ref,
    out_ref,
    *, b, t, D, r, scale, eps,
):
    f32 = jnp.float32

    # ---- 1. input embedding: (b*t, c) @ (c, D) -----------------------------
    emb = jnp.dot(x_ref[...], emb_w_ref[...], preferred_element_type=f32) + emb_b_ref[...]

    # ---- 2. LSTM over seq axis b (batch = D, features = t) -----------------
    # x.view(b, D, t): original LSTM batch row j == n*r + m maps to
    # emb[i*t + n, m*t:(m+1)*t].  We run the recurrence on a GROUP-reordered
    # batch index g = m*t + n so the reinterpretation needs only rectangular
    # slices (rows evolve independently, so any batch permutation is legal).
    x_groups = jnp.concatenate(
        [emb[:, m * t:(m + 1) * t] for m in range(r)], axis=0)            # (r*b*t, t)
    # precompute input contribution (incl. b_ih + b_hh) for every seq step
    xw = jnp.dot(x_groups, wx_ref[...], preferred_element_type=f32) + lb_ref[...]  # (r*b*t, 4t)
    wh = wh_ref[...]                                                      # (t, 4t)

    h = jnp.zeros((D, t), f32)
    c = jnp.zeros((D, t), f32)
    enc_blocks = []
    for s in range(b):  # recurrence is inherently serial; b is small & static
        gx = jnp.concatenate(
            [xw[m * (b * t) + s * t: m * (b * t) + (s + 1) * t, :] for m in range(r)],
            axis=0)                                                       # (D, 4t)
        gates = gx + jnp.dot(h, wh, preferred_element_type=f32)           # one matmul / step
        i_g = jax.nn.sigmoid(gates[:, 0 * t:1 * t])
        f_g = jax.nn.sigmoid(gates[:, 1 * t:2 * t])
        g_g = jnp.tanh(gates[:, 2 * t:3 * t])
        o_g = jax.nn.sigmoid(gates[:, 3 * t:4 * t])
        c = f_g * c + i_g * g_g
        h = o_g * jnp.tanh(c)
        # t_pe.view(b, t, D): enc row n, lanes [m*t:(m+1)*t] = h[m*t + n, :].
        # Assemble via tiny placement matmuls (lane-layout friendly).
        blk = jnp.dot(h[0:t, :], pm_ref[0], preferred_element_type=f32)
        for m in range(1, r):
            blk = blk + jnp.dot(h[m * t:(m + 1) * t, :], pm_ref[m],
                                preferred_element_type=f32)
        enc_blocks.append(blk)                                            # (t, D)
    enc_in = jnp.concatenate(enc_blocks, axis=0)                          # (b*t, D)

    # ---- 3. transformer encoder layer (post-norm, ReLU) --------------------
    qkv = jnp.dot(enc_in, wqkv_ref[...], preferred_element_type=f32) + bqkv_ref[...]  # (b*t, 3D)
    q = qkv[:, 0:D]
    k = qkv[:, D:2 * D]
    v = qkv[:, 2 * D:3 * D]
    q3 = q.reshape(b, t, D)
    msum = msum_ref[...]   # (D, nhead) one-hot head membership
    mbc = mbc_ref[...]     # (nhead, D) broadcast-back mask

    # scores of ALL query rows against key position j, batched per j
    s_list = []
    for j in range(b):
        kj = k[j * t:(j + 1) * t, :]                                      # (t, D)
        qk = (q3 * kj[None, :, :]).reshape(b * t, D)
        s_list.append(jnp.dot(qk, msum, preferred_element_type=f32) * scale)  # (b*t, nhead)

    mx = s_list[0]
    for sj in s_list[1:]:
        mx = jnp.maximum(mx, sj)
    e_list = [jnp.exp(sj - mx) for sj in s_list]
    den = e_list[0]
    for ej in e_list[1:]:
        den = den + ej
    inv = pl.reciprocal(den, approx=True)                                 # EUP, off VALU path

    ctx = None
    for j in range(b):
        p = e_list[j] * inv                                               # (b*t, nhead)
        pb = jnp.dot(p, mbc, preferred_element_type=f32).reshape(b, t, D)
        vj = v[j * t:(j + 1) * t, :]
        term = pb * vj[None, :, :]
        ctx = term if ctx is None else ctx + term                         # (b, t, D)
    ctx2 = ctx.reshape(b * t, D)

    attn = jnp.dot(ctx2, wo_ref[...], preferred_element_type=f32) + bo_ref[...]
    x1 = enc_in + attn
    mu = jnp.mean(x1, axis=-1, keepdims=True)
    var = jnp.mean(jnp.square(x1 - mu), axis=-1, keepdims=True)
    xn = (x1 - mu) * jax.lax.rsqrt(var + eps) * g1_ref[...] + be1_ref[...]

    hid = jnp.maximum(
        jnp.dot(xn, w1_ref[...], preferred_element_type=f32) + b1_ref[...], 0.0)
    ff = jnp.dot(hid, w2_ref[...], preferred_element_type=f32) + b2_ref[...]
    x2 = xn + ff
    mu2 = jnp.mean(x2, axis=-1, keepdims=True)
    var2 = jnp.mean(jnp.square(x2 - mu2), axis=-1, keepdims=True)
    y = (x2 - mu2) * jax.lax.rsqrt(var2 + eps) * g2_ref[...] + be2_ref[...]   # (b*t, D)

    # ---- 4. decoder Linear(D,1) + Flatten + fc Linear(t,2) + log_softmax ----
    dec = jnp.sum(y * wdec_ref[...], axis=-1, keepdims=True) + bdec_ref[...]  # (b*t, 1)
    logits = (
        jnp.dot(sel_ref[...], dec * fcw_ref[...], preferred_element_type=f32)
        + fcb_ref[...]
    )                                                                          # (b, 2)
    m_log = jnp.max(logits, axis=-1, keepdims=True)
    z = logits - m_log
    lse = jnp.log(jnp.sum(jnp.exp(z), axis=-1, keepdims=True))
    out_ref[...] = z - lse


# ----------------------------------------------------------------------------
# Parameter construction (deterministic, synthetic — mirrors the nn.Module shapes)
# ----------------------------------------------------------------------------
def init_params(key, channel, dmodel, nhead, dff, time_in):
    ks = jax.random.split(key, 18)
    sd = 0.1

    def rnd(i, shape):
        return (sd * jax.random.normal(ks[i], shape)).astype(jnp.float32)

    D, t = dmodel, time_in
    p = {}
    # input_embedding: nn.Linear(channel, dmodel)
    p["emb_w"] = rnd(0, (channel, D))
    p["emb_b"] = rnd(1, (1, D))
    # pos_lstm: nn.LSTM(time_in, time_in); PyTorch gate order (i, f, g, o)
    w_ih = rnd(2, (4 * t, t))
    w_hh = rnd(3, (4 * t, t))
    b_ih = rnd(4, (4 * t,))
    b_hh = rnd(5, (4 * t,))
    p["lstm_wx"] = w_ih.T                      # (t, 4t), columns ordered i|f|g|o
    p["lstm_wh"] = w_hh.T                      # (t, 4t)
    p["lstm_b"] = (b_ih + b_hh)[None, :]       # (1, 4t)
    # self-attention: fused in_proj (D, 3D) and out_proj (D, D)
    ip_w = rnd(6, (3 * D, D))
    ip_b = rnd(7, (3 * D,))
    p["wqkv"] = ip_w.T                         # (D, 3D) columns ordered q|k|v
    p["bqkv"] = ip_b[None, :]
    p["wo"] = rnd(8, (D, D)).T
    p["bo"] = rnd(9, (1, D))
    # LayerNorms (default affine init)
    p["g1"], p["be1"] = jnp.ones((1, D), jnp.float32), jnp.zeros((1, D), jnp.float32)
    p["g2"], p["be2"] = jnp.ones((1, D), jnp.float32), jnp.zeros((1, D), jnp.float32)
    # feed-forward
    p["w1"], p["b1"] = rnd(10, (dff, D)).T, rnd(11, (1, dff))
    p["w2"], p["b2"] = rnd(12, (D, dff)).T, rnd(13, (1, D))
    # decoder Linear(D, 1) (kept as a (1, D) row) and fc Linear(time_in, 2)
    p["wdec"], p["bdec"] = rnd(14, (1, D)), rnd(15, (1, 1))
    p["fc_w"], p["fc_b"] = rnd(16, (2, t)).T, rnd(17, (1, 2))
    # per-head block-diagonal masks used inside the attention kernel
    hd = D // nhead
    msum = (jnp.arange(D)[:, None] // hd == jnp.arange(nhead)[None, :]).astype(jnp.float32)
    p["msum"], p["mbc"] = msum, msum.T
    return p


# ----------------------------------------------------------------------------
# Full forward pass: one fused pallas_call
# ----------------------------------------------------------------------------
def tfeq_forward(x, params, *, dmodel, nhead):
    b, t, c = x.shape
    D = dmodel
    hd = D // nhead
    # TODO(synk): general dmodel/time_in ratios need an in-kernel flat reshape;
    # this implementation handles the dmodel % time_in == 0 case.
    assert D % t == 0, "this fused Pallas TFEQ requires dmodel % time_in == 0"
    r = D // t

    x2d = x.reshape(b * t, c)
    # derived, shape-only helper tensors (built outside the kernel, all f32)
    d_idx = jnp.arange(D)[None, None, :]
    k_idx = jnp.arange(t)[None, :, None]
    m_idx = jnp.arange(r)[:, None, None]
    pm = (d_idx == m_idx * t + k_idx).astype(jnp.float32)           # (r, t, D) placement
    fcw_tiled = jnp.tile(params["fc_w"], (b, 1))                     # (b*t, 2)
    sel = jnp.repeat(jnp.eye(b, dtype=jnp.float32), t, axis=1)       # (b, b*t) block-sum

    kernel = functools.partial(
        _tfeq_kernel, b=b, t=t, D=D, r=r, scale=1.0 / math.sqrt(hd), eps=1e-5
    )
    args = (
        x2d,
        params["emb_w"], params["emb_b"],
        params["lstm_wx"], params["lstm_wh"], params["lstm_b"], pm,
        params["wqkv"], params["bqkv"], params["wo"], params["bo"],
        params["g1"], params["be1"], params["w1"], params["b1"],
        params["w2"], params["b2"], params["g2"], params["be2"],
        params["msum"], params["mbc"],
        params["wdec"], params["bdec"], fcw_tiled, sel, params["fc_b"],
    )
    return pl.pallas_call(
        kernel,
        out_shape=jax.ShapeDtypeStruct((b, 2), jnp.float32),
        in_specs=[VMEM_SPEC] * len(args),
        out_specs=VMEM_SPEC,
    )(*args)


if __name__ == "__main__":
    # small shapes consistent with the module (t must equal time_in; D % t == 0)
    B, T, C = 2, 16, 4
    DMODEL, NHEAD, DFF = 32, 4, 32

    key = jax.random.PRNGKey(0)
    kx, kp = jax.random.split(key)
    x = jax.random.normal(kx, (B, T, C), dtype=jnp.float32)
    params = init_params(kp, C, DMODEL, NHEAD, DFF, T)

    fwd = jax.jit(functools.partial(tfeq_forward, dmodel=DMODEL, nhead=NHEAD))
    out = fwd(x, params)
    jax.block_until_ready(out)

    assert out.shape == (B, 2)
    assert bool(jnp.all(jnp.isfinite(out)))
    print("KERNEL_OK")
</pallas_src>

<mosaic_0001>
module attributes {stable_mosaic.version = 11 : i64} {
  func.func @_tfeq_kernel(%arg0: memref<32x4xf32, #tpu.memory_space<vmem>>, %arg1: memref<4x32xf32, #tpu.memory_space<vmem>>, %arg2: memref<1x32xf32, #tpu.memory_space<vmem>>, %arg3: memref<16x64xf32, #tpu.memory_space<vmem>>, %arg4: memref<16x64xf32, #tpu.memory_space<vmem>>, %arg5: memref<1x64xf32, #tpu.memory_space<vmem>>, %arg6: memref<2x16x32xf32, #tpu.memory_space<vmem>>, %arg7: memref<32x96xf32, #tpu.memory_space<vmem>>, %arg8: memref<1x96xf32, #tpu.memory_space<vmem>>, %arg9: memref<32x32xf32, #tpu.memory_space<vmem>>, %arg10: memref<1x32xf32, #tpu.memory_space<vmem>>, %arg11: memref<1x32xf32, #tpu.memory_space<vmem>>, %arg12: memref<1x32xf32, #tpu.memory_space<vmem>>, %arg13: memref<32x32xf32, #tpu.memory_space<vmem>>, %arg14: memref<1x32xf32, #tpu.memory_space<vmem>>, %arg15: memref<32x32xf32, #tpu.memory_space<vmem>>, %arg16: memref<1x32xf32, #tpu.memory_space<vmem>>, %arg17: memref<1x32xf32, #tpu.memory_space<vmem>>, %arg18: memref<1x32xf32, #tpu.memory_space<vmem>>, %arg19: memref<32x4xf32, #tpu.memory_space<vmem>>, %arg20: memref<4x32xf32, #tpu.memory_space<vmem>>, %arg21: memref<1x32xf32, #tpu.memory_space<vmem>>, %arg22: memref<1x1xf32, #tpu.memory_space<vmem>>, %arg23: memref<32x2xf32, #tpu.memory_space<vmem>>, %arg24: memref<2x32xf32, #tpu.memory_space<vmem>>, %arg25: memref<1x2xf32, #tpu.memory_space<vmem>>, %arg26: memref<2x2xf32, #tpu.memory_space<vmem>>) attributes {dimension_semantics = [], scalar_prefetch = 0 : i64, scratch_operands = 0 : i64, tpu.core_type = #tpu.core_type<tc>} {
    %c0 = arith.constant 0 : index
    %c0_0 = arith.constant 0 : index
    %0 = vector.load %arg0[%c0, %c0_0] : memref<32x4xf32, #tpu.memory_space<vmem>>, vector<32x4xf32>
    %c0_1 = arith.constant 0 : index
    %c0_2 = arith.constant 0 : index
    %1 = vector.load %arg1[%c0_1, %c0_2] : memref<4x32xf32, #tpu.memory_space<vmem>>, vector<4x32xf32>
    %cst = arith.constant dense<0.000000e+00> : vector<32x32xf32>
    %2 = tpu.matmul %0, %1, %cst {dimension_numbers = #tpu.dot_dimension_numbers<[1], [0], [0], [1], [0, 0, 1, 1], [], []>} : vector<32x4xf32>, vector<4x32xf32>, vector<32x32xf32> -> vector<32x32xf32>
    %c0_3 = arith.constant 0 : index
    %c0_4 = arith.constant 0 : index
    %3 = vector.load %arg2[%c0_3, %c0_4] : memref<1x32xf32, #tpu.memory_space<vmem>>, vector<1x32xf32>
    %4 = vector.broadcast %3 : vector<1x32xf32> to vector<32x32xf32>
    %5 = arith.addf %2, %4 : vector<32x32xf32>
    %6 = vector.extract_strided_slice %5 {offsets = [0, 0], sizes = [32, 16], strides = [1, 1]} : vector<32x32xf32> to vector<32x16xf32>
    %7 = vector.extract_strided_slice %5 {offsets = [0, 16], sizes = [32, 16], strides = [1, 1]} : vector<32x32xf32> to vector<32x16xf32>
    %8 = tpu.concatenate %6, %7 in 0 : vector<32x16xf32>, vector<32x16xf32> -> vector<64x16xf32>
    %c0_5 = arith.constant 0 : index
    %c0_6 = arith.constant 0 : index
    %9 = vector.load %arg3[%c0_5, %c0_6] : memref<16x64xf32, #tpu.memory_space<vmem>>, vector<16x64xf32>
    %cst_7 = arith.constant dense<0.000000e+00> : vector<64x64xf32>
    %10 = tpu.matmul %8, %9, %cst_7 {dimension_numbers = #tpu.dot_dimension_numbers<[1], [0], [0], [1], [0, 0, 1, 1], [], []>} : vector<64x16xf32>, vector<16x64xf32>, vector<64x64xf32> -> vector<64x64xf32>
    %c0_8 = arith.constant 0 : index
    %c0_9 = arith.constant 0 : index
    %11 = vector.load %arg5[%c0_8, %c0_9] : memref<1x64xf32, #tpu.memory_space<vmem>>, vector<1x64xf32>
    %12 = vector.broadcast %11 : vector<1x64xf32> to vector<64x64xf32>
    %13 = arith.addf %10, %12 : vector<64x64xf32>
    %c0_10 = arith.constant 0 : index
    %c0_11 = arith.constant 0 : index
    %14 = vector.load %arg4[%c0_10, %c0_11] : memref<16x64xf32, #tpu.memory_space<vmem>>, vector<16x64xf32>
    %cst_12 = arith.constant 0.000000e+00 : f32
    %15 = vector.broadcast %cst_12 : f32 to vector<32x16xf32>
    %cst_13 = arith.constant 0.000000e+00 : f32
    %16 = vector.broadcast %cst_13 : f32 to vector<32x16xf32>
    %17 = vector.extract_strided_slice %13 {offsets = [0, 0], sizes = [16, 64], strides = [1, 1]} : vector<64x64xf32> to vector<16x64xf32>
    %18 = vector.extract_strided_slice %13 {offsets = [32, 0], sizes = [16, 64], strides = [1, 1]} : vector<64x64xf32> to vector<16x64xf32>
    %19 = tpu.concatenate %17, %18 in 0 : vector<16x64xf32>, vector<16x64xf32> -> vector<32x64xf32>
    %cst_14 = arith.constant dense<0.000000e+00> : vector<32x64xf32>
    %20 = tpu.matmul %15, %14, %cst_14 {dimension_numbers = #tpu.dot_dimension_numbers<[1], [0], [0], [1], [0, 0, 1, 1], [], []>} : vector<32x16xf32>, vector<16x64xf32>, vector<32x64xf32> -> vector<32x64xf32>
    %21 = arith.addf %19, %20 : vector<32x64xf32>
    %22 = vector.extract_strided_slice %21 {offsets = [0, 0], sizes = [32, 16], strides = [1, 1]} : vector<32x64xf32> to vector<32x16xf32>
    %23 = arith.negf %22 : vector<32x16xf32>
    %24 = math.exp %23 : vector<32x16xf32>
    %cst_15 = arith.constant 1.000000e+00 : f32
    %25 = vector.broadcast %cst_15 : f32 to vector<32x16xf32>
    %26 = arith.addf %25, %24 : vector<32x16xf32>
    %27 = arith.divf %25, %26 : vector<32x16xf32>
    %28 = vector.extract_strided_slice %21 {offsets = [0, 16], sizes = [32, 16], strides = [1, 1]} : vector<32x64xf32> to vector<32x16xf32>
    %29 = arith.negf %28 : vector<32x16xf32>
    %30 = math.exp %29 : vector<32x16xf32>
    %cst_16 = arith.constant 1.000000e+00 : f32
    %31 = vector.broadcast %cst_16 : f32 to vector<32x16xf32>
    %32 = arith.addf %31, %30 : vector<32x16xf32>
    %33 = arith.divf %31, %32 : vector<32x16xf32>
    %34 = vector.extract_strided_slice %21 {offsets = [0, 32], sizes = [32, 16], strides = [1, 1]} : vector<32x64xf32> to vector<32x16xf32>
    %35 = math.tanh %34 : vector<32x16xf32>
    %36 = vector.extract_strided_slice %21 {offsets = [0, 48], sizes = [32, 16], strides = [1, 1]} : vector<32x64xf32> to vector<32x16xf32>
    %37 = arith.negf %36 : vector<32x16xf32>
    %38 = math.exp %37 : vector<32x16xf32>
    %cst_17 = arith.constant 1.000000e+00 : f32
    %39 = vector.broadcast %cst_17 : f32 to vector<32x16xf32>
    %40 = arith.addf %39, %38 : vector<32x16xf32>
    %41 = arith.divf %39, %40 : vector<32x16xf32>
    %42 = arith.mulf %33, %16 : vector<32x16xf32>
    %43 = arith.mulf %27, %35 : vector<32x16xf32>
    %44 = arith.addf %42, %43 : vector<32x16xf32>
    %45 = math.tanh %44 : vector<32x16xf32>
    %46 = arith.mulf %41, %45 : vector<32x16xf32>
    %47 = vector.extract_strided_slice %46 {offsets = [0, 0], sizes = [16, 16], strides = [1, 1]} : vector<32x16xf32> to vector<16x16xf32>
    %c0_18 = arith.constant 0 : index
    %c0_19 = arith.constant 0 : index
    %c0_20 = arith.constant 0 : index
    %48 = vector.load %arg6[%c0_18, %c0_19, %c0_20] : memref<2x16x32xf32, #tpu.memory_space<vmem>>, vector<1x16x32xf32>
    %49 = vector.shape_cast %48 : vector<1x16x32xf32> to vector<16x32xf32>
    %cst_21 = arith.constant dense<0.000000e+00> : vector<16x32xf32>
    %50 = tpu.matmul %47, %49, %cst_21 {dimension_numbers = #tpu.dot_dimension_numbers<[1], [0], [0], [1], [0, 0, 1, 1], [], []>} : vector<16x16xf32>, vector<16x32xf32>, vector<16x32xf32> -> vector<16x32xf32>
    %51 = vector.extract_strided_slice %46 {offsets = [16, 0], sizes = [16, 16], strides = [1, 1]} : vector<32x16xf32> to vector<16x16xf32>
    %c1 = arith.constant 1 : index
    %c0_22 = arith.constant 0 : index
    %c0_23 = arith.constant 0 : index
    %52 = vector.load %arg6[%c1, %c0_22, %c0_23] : memref<2x16x32xf32, #tpu.memory_space<vmem>>, vector<1x16x32xf32>
    %53 = vector.shape_cast %52 : vector<1x16x32xf32> to vector<16x32xf32>
    %cst_24 = arith.constant dense<0.000000e+00> : vector<16x32xf32>
    %54 = tpu.matmul %51, %53, %cst_24 {dimension_numbers = #tpu.dot_dimension_numbers<[1], [0], [0], [1], [0, 0, 1, 1], [], []>} : vector<16x16xf32>, vector<16x32xf32>, vector<16x32xf32> -> vector<16x32xf32>
    %55 = arith.addf %50, %54 : vector<16x32xf32>
    %56 = vector.extract_strided_slice %13 {offsets = [16, 0], sizes = [16, 64], strides = [1, 1]} : vector<64x64xf32> to vector<16x64xf32>
    %57 = vector.extract_strided_slice %13 {offsets = [48, 0], sizes = [16, 64], strides = [1, 1]} : vector<64x64xf32> to vector<16x64xf32>
    %58 = tpu.concatenate %56, %57 in 0 : vector<16x64xf32>, vector<16x64xf32> -> vector<32x64xf32>
    %cst_25 = arith.constant dense<0.000000e+00> : vector<32x64xf32>
    %59 = tpu.matmul %46, %14, %cst_25 {dimension_numbers = #tpu.dot_dimension_numbers<[1], [0], [0], [1], [0, 0, 1, 1], [], []>} : vector<32x16xf32>, vector<16x64xf32>, vector<32x64xf32> -> vector<32x64xf32>
    %60 = arith.addf %58, %59 : vector<32x64xf32>
    %61 = vector.extract_strided_slice %60 {offsets = [0, 0], sizes = [32, 16], strides = [1, 1]} : vector<32x64xf32> to vector<32x16xf32>
    %62 = arith.negf %61 : vector<32x16xf32>
    %63 = math.exp %62 : vector<32x16xf32>
    %cst_26 = arith.constant 1.000000e+00 : f32
    %64 = vector.broadcast %cst_26 : f32 to vector<32x16xf32>
    %65 = arith.addf %64, %63 : vector<32x16xf32>
    %66 = arith.divf %64, %65 : vector<32x16xf32>
    %67 = vector.extract_strided_slice %60 {offsets = [0, 16], sizes = [32, 16], strides = [1, 1]} : vector<32x64xf32> to vector<32x16xf32>
    %68 = arith.negf %67 : vector<32x16xf32>
    %69 = math.exp %68 : vector<32x16xf32>
    %cst_27 = arith.constant 1.000000e+00 : f32
    %70 = vector.broadcast %cst_27 : f32 to vector<32x16xf32>
    %71 = arith.addf %70, %69 : vector<32x16xf32>
    %72 = arith.divf %70, %71 : vector<32x16xf32>
    %73 = vector.extract_strided_slice %60 {offsets = [0, 32], sizes = [32, 16], strides = [1, 1]} : vector<32x64xf32> to vector<32x16xf32>
    %74 = math.tanh %73 : vector<32x16xf32>
    %75 = vector.extract_strided_slice %60 {offsets = [0, 48], sizes = [32, 16], strides = [1, 1]} : vector<32x64xf32> to vector<32x16xf32>
    %76 = arith.negf %75 : vector<32x16xf32>
    %77 = math.exp %76 : vector<32x16xf32>
    %cst_28 = arith.constant 1.000000e+00 : f32
    %78 = vector.broadcast %cst_28 : f32 to vector<32x16xf32>
    %79 = arith.addf %78, %77 : vector<32x16xf32>
    %80 = arith.divf %78, %79 : vector<32x16xf32>
    %81 = arith.mulf %72, %44 : vector<32x16xf32>
    %82 = arith.mulf %66, %74 : vector<32x16xf32>
    %83 = arith.addf %81, %82 : vector<32x16xf32>
    %84 = math.tanh %83 : vector<32x16xf32>
    %85 = arith.mulf %80, %84 : vector<32x16xf32>
    %86 = vector.extract_strided_slice %85 {offsets = [0, 0], sizes = [16, 16], strides = [1, 1]} : vector<32x16xf32> to vector<16x16xf32>
    %c0_29 = arith.constant 0 : index
    %c0_30 = arith.constant 0 : index
    %c0_31 = arith.constant 0 : index
    %87 = vector.load %arg6[%c0_29, %c0_30, %c0_31] : memref<2x16x32xf32, #tpu.memory_space<vmem>>, vector<1x16x32xf32>
    %88 = vector.shape_cast %87 : vector<1x16x32xf32> to vector<16x32xf32>
    %cst_32 = arith.constant dense<0.000000e+00> : vector<16x32xf32>
    %89 = tpu.matmul %86, %88, %cst_32 {dimension_numbers = #tpu.dot_dimension_numbers<[1], [0], [0], [1], [0, 0, 1, 1], [], []>} : vector<16x16xf32>, vector<16x32xf32>, vector<16x32xf32> -> vector<16x32xf32>
    %90 = vector.extract_strided_slice %85 {offsets = [16, 0], sizes = [16, 16], strides = [1, 1]} : vector<32x16xf32> to vector<16x16xf32>
    %c1_33 = arith.constant 1 : index
    %c0_34 = arith.constant 0 : index
    %c0_35 = arith.constant 0 : index
    %91 = vector.load %arg6[%c1_33, %c0_34, %c0_35] : memref<2x16x32xf32, #tpu.memory_space<vmem>>, vector<1x16x32xf32>
    %92 = vector.shape_cast %91 : vector<1x16x32xf32> to vector<16x32xf32>
    %cst_36 = arith.constant dense<0.000000e+00> : vector<16x32xf32>
    %93 = tpu.matmul %90, %92, %cst_36 {dimension_numbers = #tpu.dot_dimension_numbers<[1], [0], [0], [1], [0, 0, 1, 1], [], []>} : vector<16x16xf32>, vector<16x32xf32>, vector<16x32xf32> -> vector<16x32xf32>
    %94 = arith.addf %89, %93 : vector<16x32xf32>
    %95 = tpu.concatenate %55, %94 in 0 : vector<16x32xf32>, vector<16x32xf32> -> vector<32x32xf32>
    %c0_37 = arith.constant 0 : index
    %c0_38 = arith.constant 0 : index
    %96 = vector.load %arg7[%c0_37, %c0_38] : memref<32x96xf32, #tpu.memory_space<vmem>>, vector<32x96xf32>
    %cst_39 = arith.constant dense<0.000000e+00> : vector<32x96xf32>
    %97 = tpu.matmul %95, %96, %cst_39 {dimension_numbers = #tpu.dot_dimension_numbers<[1], [0], [0], [1], [0, 0, 1, 1], [], []>} : vector<32x32xf32>, vector<32x96xf32>, vector<32x96xf32> -> vector<32x96xf32>
    %c0_40 = arith.constant 0 : index
    %c0_41 = arith.constant 0 : index
    %98 = vector.load %arg8[%c0_40, %c0_41] : memref<1x96xf32, #tpu.memory_space<vmem>>, vector<1x96xf32>
    %99 = vector.broadcast %98 : vector<1x96xf32> to vector<32x96xf32>
    %100 = arith.addf %97, %99 : vector<32x96xf32>
    %101 = vector.extract_strided_slice %100 {offsets = [0, 0], sizes = [32, 32], strides = [1, 1]} : vector<32x96xf32> to vector<32x32xf32>
    %102 = vector.extract_strided_slice %100 {offsets = [0, 32], sizes = [32, 32], strides = [1, 1]} : vector<32x96xf32> to vector<32x32xf32>
    %103 = vector.extract_strided_slice %100 {offsets = [0, 64], sizes = [32, 32], strides = [1, 1]} : vector<32x96xf32> to vector<32x32xf32>
    %104 = vector.shape_cast %101 : vector<32x32xf32> to vector<2x16x32xf32>
    %c0_42 = arith.constant 0 : index
    %c0_43 = arith.constant 0 : index
    %105 = vector.load %arg19[%c0_42, %c0_43] : memref<32x4xf32, #tpu.memory_space<vmem>>, vector<32x4xf32>
    %c0_44 = arith.constant 0 : index
    %c0_45 = arith.constant 0 : index
    %106 = vector.load %arg20[%c0_44, %c0_45] : memref<4x32xf32, #tpu.memory_space<vmem>>, vector<4x32xf32>
    %107 = vector.extract_strided_slice %102 {offsets = [0, 0], sizes = [16, 32], strides = [1, 1]} : vector<32x32xf32> to vector<16x32xf32>
    %108 = vector.shape_cast %107 : vector<16x32xf32> to vector<1x16x32xf32>
    %109 = vector.broadcast %108 : vector<1x16x32xf32> to vector<2x16x32xf32>
    %110 = arith.mulf %104, %109 : vector<2x16x32xf32>
    %111 = vector.shape_cast %110 : vector<2x16x32xf32> to vector<32x32xf32>
    %cst_46 = arith.constant dense<0.000000e+00> : vector<32x4xf32>
    %112 = tpu.matmul %111, %105, %cst_46 {dimension_numbers = #tpu.dot_dimension_numbers<[1], [0], [0], [1], [0, 0, 1, 1], [], []>} : vector<32x32xf32>, vector<32x4xf32>, vector<32x4xf32> -> vector<32x4xf32>
    %cst_47 = arith.constant 0.353553385 : f32
    %113 = vector.broadcast %cst_47 : f32 to vector<32x4xf32>
    %114 = arith.mulf %112, %113 : vector<32x4xf32>
    %115 = vector.extract_strided_slice %102 {offsets = [16, 0], sizes = [16, 32], strides = [1, 1]} : vector<32x32xf32> to vector<16x32xf32>
    %116 = vector.shape_cast %115 : vector<16x32xf32> to vector<1x16x32xf32>
    %117 = vector.broadcast %116 : vector<1x16x32xf32> to vector<2x16x32xf32>
    %118 = arith.mulf %104, %117 : vector<2x16x32xf32>
    %119 = vector.shape_cast %118 : vector<2x16x32xf32> to vector<32x32xf32>
    %cst_48 = arith.constant dense<0.000000e+00> : vector<32x4xf32>
    %120 = tpu.matmul %119, %105, %cst_48 {dimension_numbers = #tpu.dot_dimension_numbers<[1], [0], [0], [1], [0, 0, 1, 1], [], []>} : vector<32x32xf32>, vector<32x4xf32>, vector<32x4xf32> -> vector<32x4xf32>
    %cst_49 = arith.constant 0.353553385 : f32
    %121 = vector.broadcast %cst_49 : f32 to vector<32x4xf32>
    %122 = arith.mulf %120, %121 : vector<32x4xf32>
    %123 = arith.maximumf %114, %122 : vector<32x4xf32>
    %124 = arith.subf %114, %123 : vector<32x4xf32>
    %125 = math.exp %124 : vector<32x4xf32>
    %126 = arith.subf %122, %123 : vector<32x4xf32>
    %127 = math.exp %126 : vector<32x4xf32>
    %128 = arith.addf %125, %127 : vector<32x4xf32>
    %129 = tpu.reciprocal %128 {approx = true} : vector<32x4xf32> -> vector<32x4xf32>
    %130 = arith.mulf %125, %129 : vector<32x4xf32>
    %cst_50 = arith.constant dense<0.000000e+00> : vector<32x32xf32>
    %131 = tpu.matmul %130, %106, %cst_50 {dimension_numbers = #tpu.dot_dimension_numbers<[1], [0], [0], [1], [0, 0, 1, 1], [], []>} : vector<32x4xf32>, vector<4x32xf32>, vector<32x32xf32> -> vector<32x32xf32>
    %132 = vector.shape_cast %131 : vector<32x32xf32> to vector<2x16x32xf32>
    %133 = vector.extract_strided_slice %103 {offsets = [0, 0], sizes = [16, 32], strides = [1, 1]} : vector<32x32xf32> to vector<16x32xf32>
    %134 = vector.shape_cast %133 : vector<16x32xf32> to vector<1x16x32xf32>
    %135 = vector.broadcast %134 : vector<1x16x32xf32> to vector<2x16x32xf32>
    %136 = arith.mulf %132, %135 : vector<2x16x32xf32>
    %137 = arith.mulf %127, %129 : vector<32x4xf32>
    %cst_51 = arith.constant dense<0.000000e+00> : vector<32x32xf32>
    %138 = tpu.matmul %137, %106, %cst_51 {dimension_numbers = #tpu.dot_dimension_numbers<[1], [0], [0], [1], [0, 0, 1, 1], [], []>} : vector<32x4xf32>, vector<4x32xf32>, vector<32x32xf32> -> vector<32x32xf32>
    %139 = vector.shape_cast %138 : vector<32x32xf32> to vector<2x16x32xf32>
    %140 = vector.extract_strided_slice %103 {offsets = [16, 0], sizes = [16, 32], strides = [1, 1]} : vector<32x32xf32> to vector<16x32xf32>
    %141 = vector.shape_cast %140 : vector<16x32xf32> to vector<1x16x32xf32>
    %142 = vector.broadcast %141 : vector<1x16x32xf32> to vector<2x16x32xf32>
    %143 = arith.mulf %139, %142 : vector<2x16x32xf32>
    %144 = arith.addf %136, %143 : vector<2x16x32xf32>
    %145 = vector.shape_cast %144 : vector<2x16x32xf32> to vector<32x32xf32>
    %c0_52 = arith.constant 0 : index
    %c0_53 = arith.constant 0 : index
    %146 = vector.load %arg9[%c0_52, %c0_53] : memref<32x32xf32, #tpu.memory_space<vmem>>, vector<32x32xf32>
    %cst_54 = arith.constant dense<0.000000e+00> : vector<32x32xf32>
    %147 = tpu.matmul %145, %146, %cst_54 {dimension_numbers = #tpu.dot_dimension_numbers<[1], [0], [0], [1], [0, 0, 1, 1], [], []>} : vector<32x32xf32>, vector<32x32xf32>, vector<32x32xf32> -> vector<32x32xf32>
    %c0_55 = arith.constant 0 : index
    %c0_56 = arith.constant 0 : index
    %148 = vector.load %arg10[%c0_55, %c0_56] : memref<1x32xf32, #tpu.memory_space<vmem>>, vector<1x32xf32>
    %149 = vector.broadcast %148 : vector<1x32xf32> to vector<32x32xf32>
    %150 = arith.addf %147, %149 : vector<32x32xf32>
    %151 = arith.addf %95, %150 : vector<32x32xf32>
    %cst_57 = arith.constant dense<0.000000e+00> : vector<32xf32>
    %152 = vector.multi_reduction <add>, %151, %cst_57 [1] : vector<32x32xf32> to vector<32xf32>
    %153 = vector.shape_cast %152 : vector<32xf32> to vector<32x1xf32>
    %cst_58 = arith.constant 3.200000e+01 : f32
    %154 = vector.broadcast %cst_58 : f32 to vector<32x1xf32>
    %155 = arith.divf %153, %154 : vector<32x1xf32>
    %156 = vector.broadcast %155 : vector<32x1xf32> to vector<32x32xf32>
    %157 = arith.subf %151, %156 : vector<32x32xf32>
    %158 = arith.mulf %157, %157 : vector<32x32xf32>
    %cst_59 = arith.constant dense<0.000000e+00> : vector<32xf32>
    %159 = vector.multi_reduction <add>, %158, %cst_59 [1] : vector<32x32xf32> to vector<32xf32>
    %160 = vector.shape_cast %159 : vector<32xf32> to vector<32x1xf32>
    %cst_60 = arith.constant 3.200000e+01 : f32
    %161 = vector.broadcast %cst_60 : f32 to vector<32x1xf32>
    %162 = arith.divf %160, %161 : vector<32x1xf32>
    %163 = vector.broadcast %155 : vector<32x1xf32> to vector<32x32xf32>
    %164 = arith.subf %151, %163 : vector<32x32xf32>
    %cst_61 = arith.constant 9.99999974E-6 : f32
    %165 = vector.broadcast %cst_61 : f32 to vector<32x1xf32>
    %166 = arith.addf %162, %165 : vector<32x1xf32>
    %167 = math.rsqrt %166 : vector<32x1xf32>
    %168 = vector.broadcast %167 : vector<32x1xf32> to vector<32x32xf32>
    %169 = arith.mulf %164, %168 : vector<32x32xf32>
    %c0_62 = arith.constant 0 : index
    %c0_63 = arith.constant 0 : index
    %170 = vector.load %arg11[%c0_62, %c0_63] : memref<1x32xf32, #tpu.memory_space<vmem>>, vector<1x32xf32>
    %171 = vector.broadcast %170 : vector<1x32xf32> to vector<32x32xf32>
    %172 = arith.mulf %169, %171 : vector<32x32xf32>
    %c0_64 = arith.constant 0 : index
    %c0_65 = arith.constant 0 : index
    %173 = vector.load %arg12[%c0_64, %c0_65] : memref<1x32xf32, #tpu.memory_space<vmem>>, vector<1x32xf32>
    %174 = vector.broadcast %173 : vector<1x32xf32> to vector<32x32xf32>
    %175 = arith.addf %172, %174 : vector<32x32xf32>
    %c0_66 = arith.constant 0 : index
    %c0_67 = arith.constant 0 : index
    %176 = vector.load %arg13[%c0_66, %c0_67] : memref<32x32xf32, #tpu.memory_space<vmem>>, vector<32x32xf32>
    %cst_68 = arith.constant dense<0.000000e+00> : vector<32x32xf32>
    %177 = tpu.matmul %175, %176, %cst_68 {dimension_numbers = #tpu.dot_dimension_numbers<[1], [0], [0], [1], [0, 0, 1, 1], [], []>} : vector<32x32xf32>, vector<32x32xf32>, vector<32x32xf32> -> vector<32x32xf32>
    %c0_69 = arith.constant 0 : index
    %c0_70 = arith.constant 0 : index
    %178 = vector.load %arg14[%c0_69, %c0_70] : memref<1x32xf32, #tpu.memory_space<vmem>>, vector<1x32xf32>
    %179 = vector.broadcast %178 : vector<1x32xf32> to vector<32x32xf32>
    %180 = arith.addf %177, %179 : vector<32x32xf32>
    %cst_71 = arith.constant 0.000000e+00 : f32
    %181 = vector.broadcast %cst_71 : f32 to vector<32x32xf32>
    %182 = arith.maximumf %180, %181 : vector<32x32xf32>
    %c0_72 = arith.constant 0 : index
    %c0_73 = arith.constant 0 : index
    %183 = vector.load %arg15[%c0_72, %c0_73] : memref<32x32xf32, #tpu.memory_space<vmem>>, vector<32x32xf32>
    %cst_74 = arith.constant dense<0.000000e+00> : vector<32x32xf32>
    %184 = tpu.matmul %182, %183, %cst_74 {dimension_numbers = #tpu.dot_dimension_numbers<[1], [0], [0], [1], [0, 0, 1, 1], [], []>} : vector<32x32xf32>, vector<32x32xf32>, vector<32x32xf32> -> vector<32x32xf32>
    %c0_75 = arith.constant 0 : index
    %c0_76 = arith.constant 0 : index
    %185 = vector.load %arg16[%c0_75, %c0_76] : memref<1x32xf32, #tpu.memory_space<vmem>>, vector<1x32xf32>
    %186 = vector.broadcast %185 : vector<1x32xf32> to vector<32x32xf32>
    %187 = arith.addf %184, %186 : vector<32x32xf32>
    %188 = arith.addf %175, %187 : vector<32x32xf32>
    %cst_77 = arith.constant dense<0.000000e+00> : vector<32xf32>
    %189 = vector.multi_reduction <add>, %188, %cst_77 [1] : vector<32x32xf32> to vector<32xf32>
    %190 = vector.shape_cast %189 : vector<32xf32> to vector<32x1xf32>
    %cst_78 = arith.constant 3.200000e+01 : f32
    %191 = vector.broadcast %cst_78 : f32 to vector<32x1xf32>
    %192 = arith.divf %190, %191 : vector<32x1xf32>
    %193 = vector.broadcast %192 : vector<32x1xf32> to vector<32x32xf32>
    %194 = arith.subf %188, %193 : vector<32x32xf32>
    %195 = arith.mulf %194, %194 : vector<32x32xf32>
    %cst_79 = arith.constant dense<0.000000e+00> : vector<32xf32>
    %196 = vector.multi_reduction <add>, %195, %cst_79 [1] : vector<32x32xf32> to vector<32xf32>
    %197 = vector.shape_cast %196 : vector<32xf32> to vector<32x1xf32>
    %cst_80 = arith.constant 3.200000e+01 : f32
    %198 = vector.broadcast %cst_80 : f32 to vector<32x1xf32>
    %199 = arith.divf %197, %198 : vector<32x1xf32>
    %200 = vector.broadcast %192 : vector<32x1xf32> to vector<32x32xf32>
    %201 = arith.subf %188, %200 : vector<32x32xf32>
    %cst_81 = arith.constant 9.99999974E-6 : f32
    %202 = vector.broadcast %cst_81 : f32 to vector<32x1xf32>
    %203 = arith.addf %199, %202 : vector<32x1xf32>
    %204 = math.rsqrt %203 : vector<32x1xf32>
    %205 = vector.broadcast %204 : vector<32x1xf32> to vector<32x32xf32>
    %206 = arith.mulf %201, %205 : vector<32x32xf32>
    %c0_82 = arith.constant 0 : index
    %c0_83 = arith.constant 0 : index
    %207 = vector.load %arg17[%c0_82, %c0_83] : memref<1x32xf32, #tpu.memory_space<vmem>>, vector<1x32xf32>
    %208 = vector.broadcast %207 : vector<1x32xf32> to vector<32x32xf32>
    %209 = arith.mulf %206, %208 : vector<32x32xf32>
    %c0_84 = arith.constant 0 : index
    %c0_85 = arith.constant 0 : index
    %210 = vector.load %arg18[%c0_84, %c0_85] : memref<1x32xf32, #tpu.memory_space<vmem>>, vector<1x32xf32>
    %211 = vector.broadcast %210 : vector<1x32xf32> to vector<32x32xf32>
    %212 = arith.addf %209, %211 : vector<32x32xf32>
    %c0_86 = arith.constant 0 : index
    %c0_87 = arith.constant 0 : index
    %213 = vector.load %arg21[%c0_86, %c0_87] : memref<1x32xf32, #tpu.memory_space<vmem>>, vector<1x32xf32>
    %214 = vector.broadcast %213 : vector<1x32xf32> to vector<32x32xf32>
    %215 = arith.mulf %212, %214 : vector<32x32xf32>
    %cst_88 = arith.constant dense<0.000000e+00> : vector<32xf32>
    %216 = vector.multi_reduction <add>, %215, %cst_88 [1] : vector<32x32xf32> to vector<32xf32>
    %217 = vector.shape_cast %216 : vector<32xf32> to vector<32x1xf32>
    %c0_89 = arith.constant 0 : index
    %c0_90 = arith.constant 0 : index
    %218 = vector.load %arg22[%c0_89, %c0_90] : memref<1x1xf32, #tpu.memory_space<vmem>>, vector<1x1xf32>
    %219 = vector.broadcast %218 : vector<1x1xf32> to vector<32x1xf32>
    %220 = arith.addf %217, %219 : vector<32x1xf32>
    %c0_91 = arith.constant 0 : index
    %c0_92 = arith.constant 0 : index
    %221 = vector.load %arg24[%c0_91, %c0_92] : memref<2x32xf32, #tpu.memory_space<vmem>>, vector<2x32xf32>
    %c0_93 = arith.constant 0 : index
    %c0_94 = arith.constant 0 : index
    %222 = vector.load %arg23[%c0_93, %c0_94] : memref<32x2xf32, #tpu.memory_space<vmem>>, vector<32x2xf32>
    %223 = vector.broadcast %220 : vector<32x1xf32> to vector<32x2xf32>
    %224 = arith.mulf %223, %222 : vector<32x2xf32>
    %cst_95 = arith.constant dense<0.000000e+00> : vector<2x2xf32>
    %225 = tpu.matmul %221, %224, %cst_95 {dimension_numbers = #tpu.dot_dimension_numbers<[1], [0], [0], [1], [0, 0, 1, 1], [], []>} : vector<2x32xf32>, vector<32x2xf32>, vector<2x2xf32> -> vector<2x2xf32>
    %c0_96 = arith.constant 0 : index
    %c0_97 = arith.constant 0 : index
    %226 = vector.load %arg25[%c0_96, %c0_97] : memref<1x2xf32, #tpu.memory_space<vmem>>, vector<1x2xf32>
    %227 = vector.broadcast %226 : vector<1x2xf32> to vector<2x2xf32>
    %228 = arith.addf %225, %227 : vector<2x2xf32>
    %cst_98 = arith.constant dense<0xFF800000> : vector<2xf32>
    %229 = vector.multi_reduction <maximumf>, %228, %cst_98 [1] : vector<2x2xf32> to vector<2xf32>
    %230 = vector.shape_cast %229 : vector<2xf32> to vector<2x1xf32>
    %231 = vector.broadcast %230 : vector<2x1xf32> to vector<2x2xf32>
    %232 = arith.subf %228, %231 : vector<2x2xf32>
    %233 = math.exp %232 : vector<2x2xf32>
    %cst_99 = arith.constant dense<0.000000e+00> : vector<2xf32>
    %234 = vector.multi_reduction <add>, %233, %cst_99 [1] : vector<2x2xf32> to vector<2xf32>
    %235 = vector.shape_cast %234 : vector<2xf32> to vector<2x1xf32>
    %236 = math.log %235 : vector<2x1xf32>
    %237 = vector.broadcast %236 : vector<2x1xf32> to vector<2x2xf32>
    %238 = arith.subf %232, %237 : vector<2x2xf32>
    %c0_100 = arith.constant 0 : index
    %c0_101 = arith.constant 0 : index
    %239 = vector.load %arg26[%c0_100, %c0_101] : memref<2x2xf32, #tpu.memory_space<vmem>>, vector<2x2xf32>
    tpu.vector_store %arg26[%c0_100, %c0_101], %238 {strides = array<i32>} : memref<2x2xf32, #tpu.memory_space<vmem>>, vector<2x2xf32>,
    return
  }
}

</mosaic_0001>

<llo_original>
// kernel: tfeq_forward.1
$region0: #{tfeq_forward.1}
  #allocation0 [shape = 'u32[]', space=smem, size = 0x4, offset = 0x4, fixed_abs, tag = 'smem constant byte address 0x4 - core index']
  #allocation1 [shape = 'u32[72,128]{1,0:T(1,128)}', space=vmem, size = 0x9000, scoped, tag = 'internal scratch']
  #allocation2 [shape = 'f32[1,1]{1,0:T(1,128)S(1)}', space=vmem, size = 0x200, scoped, tag = 'scoped memory for tfeq_forward.1']
  %s0 = inlined_call_operand.vmem [shape: f32[32,4], index: 0, kind: input, shape index: {}]
  %s1 = inlined_call_operand.vmem [shape: f32[4,32], index: 1, kind: input, shape index: {}]
  %s2 = inlined_call_operand.vmem [shape: f32[1,32], index: 2, kind: input, shape index: {}]
  %s3 = inlined_call_operand.vmem [shape: f32[16,64], index: 3, kind: input, shape index: {}]
  %s4 = inlined_call_operand.vmem [shape: f32[16,64], index: 4, kind: input, shape index: {}]
  %s5 = inlined_call_operand.vmem [shape: f32[1,64], index: 5, kind: input, shape index: {}]
  %s6 = inlined_call_operand.vmem [shape: f32[2,16,32], index: 6, kind: input, shape index: {}]
  %s7 = inlined_call_operand.vmem [shape: f32[32,96], index: 7, kind: input, shape index: {}]
  %s8 = inlined_call_operand.vmem [shape: f32[1,96], index: 8, kind: input, shape index: {}]
  %s9 = inlined_call_operand.vmem [shape: f32[32,32], index: 9, kind: input, shape index: {}]
  %s10 = inlined_call_operand.vmem [shape: f32[1,32], index: 10, kind: input, shape index: {}]
  %s11 = inlined_call_operand.vmem [shape: f32[1,32], index: 11, kind: input, shape index: {}]
  %s12 = inlined_call_operand.vmem [shape: f32[1,32], index: 12, kind: input, shape index: {}]
  %s13 = inlined_call_operand.vmem [shape: f32[32,32], index: 13, kind: input, shape index: {}]
  %s14 = inlined_call_operand.vmem [shape: f32[1,32], index: 14, kind: input, shape index: {}]
  %s15 = inlined_call_operand.vmem [shape: f32[32,32], index: 15, kind: input, shape index: {}]
  %s16 = inlined_call_operand.vmem [shape: f32[1,32], index: 16, kind: input, shape index: {}]
  %s17 = inlined_call_operand.vmem [shape: f32[1,32], index: 17, kind: input, shape index: {}]
  %s18 = inlined_call_operand.vmem [shape: f32[1,32], index: 18, kind: input, shape index: {}]
  %s19 = inlined_call_operand.vmem [shape: f32[32,4], index: 19, kind: input, shape index: {}]
  %s20 = inlined_call_operand.vmem [shape: f32[4,32], index: 20, kind: input, shape index: {}]
  %s21 = inlined_call_operand.vmem [shape: f32[1,32], index: 21, kind: input, shape index: {}]
  %s22 = inlined_call_operand.<no memory space> [shape: f32[1,1], index: 22, kind: input, shape index: {}]
  %s23 = inlined_call_operand.vmem [shape: f32[32,2], index: 23, kind: input, shape index: {}]
  %s24 = inlined_call_operand.vmem [shape: f32[2,32], index: 24, kind: input, shape index: {}]
  %s25 = inlined_call_operand.vmem [shape: f32[1,2], index: 25, kind: input, shape index: {}]
  %s26 = inlined_call_operand.hbm [shape: f32[2,2], index: 26, kind: output, shape index: {}]
  %s27 = sld [smem:[#allocation0]]
  $region114: #{tfeq_forward.1} parent=0
    _
  %s29 = ssub.s32 1, %s27
  %s30 = scalar_select 0, %s29, %s27
  %v31 = vstv %s22
  %32 = vst [vmem:[#allocation2] sm:$0x1] %v31
  $region1: #{tfeq_forward.1} parent=0
    #allocation3 [shape = 'u8[1024]{0}', space=vmem, size = 0x400, scoped, tag = 'output window, operand 0, single buffered']
    #allocation4 [shape = 's32[1]{0}', space=sflag, size = 0x4, scoped, tag = 'scoped memory for tfeq_forward.1']
    %33 = vsyncpa [#allocation4], 0
    // Predicated region
    $region2: #{tfeq_forward.1} parent=1 // pred_check
      _
    $region3: #{tfeq_forward.1} parent=1 // pred_check_branch
      %35 = sbr.rel (0) target = $region5
    $region4: #{tfeq_forward.1} parent=1 // pred_region
      _
    $region5: #{tfeq_forward.1} parent=1 // pred_fallthru
      _
    // Predicated region
    $region6: #{tfeq_forward.1} parent=1 // pred_check
      _
    $region7: #{tfeq_forward.1} parent=1 // pred_check_branch
      %37 = sbr.rel (0) target = $region9
    $region8: #{tfeq_forward.1} parent=1 // pred_region
      _
    $region9: #{tfeq_forward.1} parent=1 // pred_fallthru
      _
    // Predicated region
    $region10: #{tfeq_forward.1} parent=1 // pred_check
      _
    $region11: #{tfeq_forward.1} parent=1 // pred_check_branch
      %39 = sbr.rel (0) target = $region13
    $region12: #{tfeq_forward.1} parent=1 // pred_region
      _
    $region13: #{tfeq_forward.1} parent=1 // pred_fallthru
      _
    // Predicated region
    $region14: #{tfeq_forward.1} parent=1 // pred_check
      _
    $region15: #{tfeq_forward.1} parent=1 // pred_check_branch
      %41 = sbr.rel (0) target = $region17
    $region16: #{tfeq_forward.1} parent=1 // pred_region
      _
    $region17: #{tfeq_forward.1} parent=1 // pred_fallthru
      _
    // Predicated region
    $region18: #{tfeq_forward.1} parent=1 // pred_check
      _
    $region19: #{tfeq_forward.1} parent=1 // pred_check_branch
      %43 = sbr.rel (0) target = $region21
    $region20: #{tfeq_forward.1} parent=1 // pred_region
      _
    $region21: #{tfeq_forward.1} parent=1 // pred_fallthru
      _
    // Predicated region
    $region22: #{tfeq_forward.1} parent=1 // pred_check
      _
    $region23: #{tfeq_forward.1} parent=1 // pred_check_branch
      %45 = sbr.rel (0) target = $region25
    $region24: #{tfeq_forward.1} parent=1 // pred_region
      _
    $region25: #{tfeq_forward.1} parent=1 // pred_fallthru
      _
    // Predicated region
    $region26: #{tfeq_forward.1} parent=1 // pred_check
      _
    $region27: #{tfeq_forward.1} parent=1 // pred_check_branch
      %47 = sbr.rel (0) target = $region29
    $region28: #{tfeq_forward.1} parent=1 // pred_region
      _
    $region29: #{tfeq_forward.1} parent=1 // pred_fallthru
      _
    // Predicated region
    $region30: #{tfeq_forward.1} parent=1 // pred_check
      _
    $region31: #{tfeq_forward.1} parent=1 // pred_check_branch
      %49 = sbr.rel (0) target = $region33
    $region32: #{tfeq_forward.1} parent=1 // pred_region
      _
    $region33: #{tfeq_forward.1} parent=1 // pred_fallthru
      _
    // Predicated region
    $region34: #{tfeq_forward.1} parent=1 // pred_check
      _
    $region35: #{tfeq_forward.1} parent=1 // pred_check_branch
      %51 = sbr.rel (0) target = $region37
    $region36: #{tfeq_forward.1} parent=1 // pred_region
      _
    $region37: #{tfeq_forward.1} parent=1 // pred_fallthru
      _
    // Predicated region
    $region38: #{tfeq_forward.1} parent=1 // pred_check
      _
    $region39: #{tfeq_forward.1} parent=1 // pred_check_branch
      %53 = sbr.rel (0) target = $region41
    $region40: #{tfeq_forward.1} parent=1 // pred_region
      _
    $region41: #{tfeq_forward.1} parent=1 // pred_fallthru
      _
    // Predicated region
    $region42: #{tfeq_forward.1} parent=1 // pred_check
      _
    $region43: #{tfeq_forward.1} parent=1 // pred_check_branch
      %55 = sbr.rel (0) target = $region45
    $region44: #{tfeq_forward.1} parent=1 // pred_region
      _
    $region45: #{tfeq_forward.1} parent=1 // pred_fallthru
      _
    // Predicated region
    $region46: #{tfeq_forward.1} parent=1 // pred_check
      _
    $region47: #{tfeq_forward.1} parent=1 // pred_check_branch
      %57 = sbr.rel (0) target = $region49
    $region48: #{tfeq_forward.1} parent=1 // pred_region
      _
    $region49: #{tfeq_forward.1} parent=1 // pred_fallthru
      _
    // Predicated region
    $region50: #{tfeq_forward.1} parent=1 // pred_check
      _
    $region51: #{tfeq_forward.1} parent=1 // pred_check_branch
      %59 = sbr.rel (0) target = $region53
    $region52: #{tfeq_forward.1} parent=1 // pred_region
      _
    $region53: #{tfeq_forward.1} parent=1 // pred_fallthru
      _
    // Predicated region
    $region54: #{tfeq_forward.1} parent=1 // pred_check
      _
    $region55: #{tfeq_forward.1} parent=1 // pred_check_branch
      %61 = sbr.rel (0) target = $region57
    $region56: #{tfeq_forward.1} parent=1 // pred_region
      _
    $region57: #{tfeq_forward.1} parent=1 // pred_fallthru
      _
    // Predicated region
    $region58: #{tfeq_forward.1} parent=1 // pred_check
      _
    $region59: #{tfeq_forward.1} parent=1 // pred_check_branch
      %63 = sbr.rel (0) target = $region61
    $region60: #{tfeq_forward.1} parent=1 // pred_region
      _
    $region61: #{tfeq_forward.1} parent=1 // pred_fallthru
      _
    // Predicated region
    $region62: #{tfeq_forward.1} parent=1 // pred_check
      _
    $region63: #{tfeq_forward.1} parent=1 // pred_check_branch
      %65 = sbr.rel (0) target = $region65
    $region64: #{tfeq_forward.1} parent=1 // pred_region
      _
    $region65: #{tfeq_forward.1} parent=1 // pred_fallthru
      _
    // Predicated region
    $region66: #{tfeq_forward.1} parent=1 // pred_check
      _
    $region67: #{tfeq_forward.1} parent=1 // pred_check_branch
      %67 = sbr.rel (0) target = $region69
    $region68: #{tfeq_forward.1} parent=1 // pred_region
      _
    $region69: #{tfeq_forward.1} parent=1 // pred_fallthru
      _
    // Predicated region
    $region70: #{tfeq_forward.1} parent=1 // pred_check
      _
    $region71: #{tfeq_forward.1} parent=1 // pred_check_branch
      %69 = sbr.rel (0) target = $region73
    $region72: #{tfeq_forward.1} parent=1 // pred_region
      _
    $region73: #{tfeq_forward.1} parent=1 // pred_fallthru
      _
    // Predicated region
    $region74: #{tfeq_forward.1} parent=1 // pred_check
      _
    $region75: #{tfeq_forward.1} parent=1 // pred_check_branch
      %71 = sbr.rel (0) target = $region77
    $region76: #{tfeq_forward.1} parent=1 // pred_region
      _
    $region77: #{tfeq_forward.1} parent=1 // pred_fallthru
      _
    // Predicated region
    $region78: #{tfeq_forward.1} parent=1 // pred_check
      _
    $region79: #{tfeq_forward.1} parent=1 // pred_check_branch
      %73 = sbr.rel (0) target = $region81
    $region80: #{tfeq_forward.1} parent=1 // pred_region
      _
    $region81: #{tfeq_forward.1} parent=1 // pred_fallthru
      _
    // Predicated region
    $region82: #{tfeq_forward.1} parent=1 // pred_check
      _
    $region83: #{tfeq_forward.1} parent=1 // pred_check_branch
      %75 = sbr.rel (0) target = $region85
    $region84: #{tfeq_forward.1} parent=1 // pred_region
      _
    $region85: #{tfeq_forward.1} parent=1 // pred_fallthru
      _
    // Predicated region
    $region86: #{tfeq_forward.1} parent=1 // pred_check
      _
    $region87: #{tfeq_forward.1} parent=1 // pred_check_branch
      %77 = sbr.rel (0) target = $region89
    $region88: #{tfeq_forward.1} parent=1 // pred_region
      _
    $region89: #{tfeq_forward.1} parent=1 // pred_fallthru
      _
    // Predicated region
    $region90: #{tfeq_forward.1} parent=1 // pred_check
      _
    $region91: #{tfeq_forward.1} parent=1 // pred_check_branch
      %79 = sbr.rel (0) target = $region93
    $region92: #{tfeq_forward.1} parent=1 // pred_region
      _
    $region93: #{tfeq_forward.1} parent=1 // pred_fallthru
      _
    // Predicated region
    $region94: #{tfeq_forward.1} parent=1 // pred_check
      _
    $region95: #{tfeq_forward.1} parent=1 // pred_check_branch
      %81 = sbr.rel (0) target = $region97
    $region96: #{tfeq_forward.1} parent=1 // pred_region
      _
    $region97: #{tfeq_forward.1} parent=1 // pred_fallthru
      _
    // Predicated region
    $region98: #{tfeq_forward.1} parent=1 // pred_check
      _
    $region99: #{tfeq_forward.1} parent=1 // pred_check_branch
      %83 = sbr.rel (0) target = $region101
    $region100: #{tfeq_forward.1} parent=1 // pred_region
      _
    $region101: #{tfeq_forward.1} parent=1 // pred_fallthru
      _
    // Predicated region
    $region102: #{tfeq_forward.1} parent=1 // pred_check
      _
    $region103: #{tfeq_forward.1} parent=1 // pred_check_branch
      %85 = sbr.rel (0) target = $region105
    $region104: #{tfeq_forward.1} parent=1 // pred_region
      _
    $region105: #{tfeq_forward.1} parent=1 // pred_fallthru
      _
    %v86 = vld [vmem:[%s0] sm:$0xff]
    %v87 = vld [vmem:[%s0 + $0x8] sm:$0xff]
    %v88 = vld [vmem:[%s0 + $0x10] sm:$0xff]
    %v89 = vld [vmem:[%s0 + $0x18] sm:$0xff]
    %v90 = vld [vmem:[%s1] sm:$0xf]
    %v91 = vld [vmem:[%s2] sm:$0x1]
    %v93 = vperm.slane %v91, 0
    %vm95 = vcmask 31744
    %v97 = vsel %vm95, %v86, 0
    %v100 = vsel %vm95, %v87, 0
    %v103 = vsel %vm95, %v88, 0
    %v106 = vsel %vm95, %v89, 0
    %vm108 = vcmask 1043456
    %v110 = vsel %vm108, %v90, 0
    %112 = vmatpush.msra.mxu0 0.0
    %113 = vmatpush.msra.mxu0 0.0
    %114 = vmatpush.msra.mxu0 0.0
    %115 = vmatpush.msra.mxu0 0.0
    %116 = vmatpush.msra.mxu0 0.0
    %117 = vmatpush.msra.mxu0 0.0
    %118 = vmatpush.msra.mxu0 0.0
    %119 = vmatpush.msra.mxu0 0.0
    %120 = vmatpush.msra.mxu0 0.0
    %121 = vmatpush.msra.mxu0 0.0
    %122 = vmatpush.msra.mxu0 0.0
    %123 = vmatpush.msra.mxu0 0.0
    %124 = vmatpush.msra.mxu0 0.0
    %125 = vmatpush.msra.mxu0 0.0
    %126 = vmatpush.msra.mxu0 0.0
    %127 = vmatpush.msra.mxu0 %v110
    %128 = vmatmul.f32.gmra.mxu0 %v97
    %v129 = vpop.f32.mrf.mxu0
    %v130 = vadd.f32 %v93, %v129
    %131 = vmatmul.f32.gmra.mxu0 %v100
    %v132 = vpop.f32.mrf.mxu0
    %v133 = vadd.f32 %v93, %v132
    %134 = vmatmul.f32.gmra.mxu0 %v103
    %v135 = vpop.f32.mrf.mxu0
    %v136 = vadd.f32 %v93, %v135
    %137 = vmatmul.f32.gmra.mxu0 %v106
    %v138 = vpop.f32.mrf.mxu0
    %v139 = vadd.f32 %v93, %v138
    %140 = vdwg.mxu0
    %145 = vrot.lane.b32.xlu0 %v130, 112
    %v146 = vpop.permute.xlu0 %145
    %147 = vrot.lane.b32.xlu0 %v133, 112
    %v148 = vpop.permute.xlu0 %147
    %149 = vrot.lane.b32.xlu0 %v136, 112
    %v150 = vpop.permute.xlu0 %149
    %151 = vrot.lane.b32.xlu0 %v139, 112
    %v152 = vpop.permute.xlu0 %151
    %v153 = vld [vmem:[%s3] sm:$0xff]
    %v154 = vld [vmem:[%s3 + $0x8] sm:$0xff]
    %v155 = vld [vmem:[%s5] sm:$0x1]
    %v157 = vperm.slane %v155, 0
    %vm159 = vcmask 130048
    %v160 = vsel %vm159, %v130, 0
    %v162 = vsel %vm159, %v133, 0
    %v164 = vsel %vm159, %v136, 0
    %v166 = vsel %vm159, %v139, 0
    %v168 = vsel %vm159, %v146, 0
    %v170 = vsel %vm159, %v148, 0
    %v172 = vsel %vm159, %v150, 0
    %v174 = vsel %vm159, %v152, 0
    %176 = vmatpush.msra.mxu0 0.0
    %177 = vmatpush.msra.mxu0 0.0
    %178 = vmatpush.msra.mxu0 0.0
    %179 = vmatpush.msra.mxu0 0.0
    %180 = vmatpush.msra.mxu0 0.0
    %181 = vmatpush.msra.mxu0 0.0
    %182 = vmatpush.msra.mxu0 0.0
    %183 = vmatpush.msra.mxu0 0.0
    %184 = vmatpush.msra.mxu0 0.0
    %185 = vmatpush.msra.mxu0 0.0
    %186 = vmatpush.msra.mxu0 0.0
    %187 = vmatpush.msra.mxu0 0.0
    %188 = vmatpush.msra.mxu0 0.0
    %189 = vmatpush.msra.mxu0 0.0
    %190 = vmatpush.msra.mxu0 %v154
    %191 = vmatpush.msra.mxu0 %v153
    %192 = vmatmul.f32.gmra.mxu0 %v160
    %v193 = vpop.f32.mrf.mxu0
    %v194 = vadd.f32 %v157, %v193
    %195 = vmatmul.f32.gmra.mxu0 %v162
    %v196 = vpop.f32.mrf.mxu0
    %v197 = vadd.f32 %v157, %v196
    %198 = vmatmul.f32.gmra.mxu0 %v164
    %v199 = vpop.f32.mrf.mxu0
    %v200 = vadd.f32 %v157, %v199
    %201 = vmatmul.f32.gmra.mxu0 %v166
    %v202 = vpop.f32.mrf.mxu0
    %v203 = vadd.f32 %v157, %v202
    %204 = vmatmul.f32.gmra.mxu0 %v168
    %v205 = vpop.f32.mrf.mxu0
    %v206 = vadd.f32 %v157, %v205
    %207 = vmatmul.f32.gmra.mxu0 %v170
    %v208 = vpop.f32.mrf.mxu0
    %v209 = vadd.f32 %v157, %v208
    %210 = vmatmul.f32.gmra.mxu0 %v172
    %v211 = vpop.f32.mrf.mxu0
    %v212 = vadd.f32 %v157, %v211
    %213 = vmatmul.f32.gmra.mxu0 %v174
    %v214 = vpop.f32.mrf.mxu0
    %v215 = vadd.f32 %v157, %v214
    %216 = vdwg.mxu0
    %v217 = vld [vmem:[%s4] sm:$0xff]
    %v218 = vld [vmem:[%s4 + $0x8] sm:$0xff]
    %v220 = vsel %vm159, 0.0, 0
    %222 = vmatpush.msra.mxu0 0.0
    %223 = vmatpush.msra.mxu0 0.0
    %224 = vmatpush.msra.mxu0 0.0
    %225 = vmatpush.msra.mxu0 0.0
    %226 = vmatpush.msra.mxu0 0.0
    %227 = vmatpush.msra.mxu0 0.0
    %228 = vmatpush.msra.mxu0 0.0
    %229 = vmatpush.msra.mxu0 0.0
    %230 = vmatpush.msra.mxu0 0.0
    %231 = vmatpush.msra.mxu0 0.0
    %232 = vmatpush.msra.mxu0 0.0
    %233 = vmatpush.msra.mxu0 0.0
    %234 = vmatpush.msra.mxu0 0.0
    %235 = vmatpush.msra.mxu0 0.0
    %236 = vmatpush.msra.mxu0 %v218
    %237 = vmatpush.msra.mxu0 %v217
    %238 = vmatmul.f32.gmra.mxu0 %v220
    %v239 = vpop.f32.mrf.mxu0
    %v240 = vadd.f32 0.0, %v239
    %241 = vmatmul.f32.gmra.mxu0 %v220
    %v242 = vpop.f32.mrf.mxu0
    %v243 = vadd.f32 0.0, %v242
    %244 = vmatmul.f32.gmra.mxu0 %v220
    %v245 = vpop.f32.mrf.mxu0
    %v246 = vadd.f32 0.0, %v245
    %247 = vmatmul.f32.gmra.mxu0 %v220
    %v248 = vpop.f32.mrf.mxu0
    %v249 = vadd.f32 0.0, %v248
    %250 = vdwg.mxu0
    %v251 = vadd.f32 %v194, %v240
    %v252 = vadd.f32 %v197, %v243
    %v253 = vadd.f32 %v206, %v246
    %v254 = vadd.f32 %v209, %v249
    %v255 = vxor.u32 %v251, 2147483648
    %v256 = vxor.u32 %v252, 2147483648
    %v257 = vxor.u32 %v253, 2147483648
    %v258 = vxor.u32 %v254, 2147483648
    %v259 = vmul.f32 %v255, 1.442695
    %v260 = vpow.pop %v259
    %v261 = vmul.f32 %v256, 1.442695
    %v262 = vpow.pop %v261
    %v263 = vmul.f32 %v257, 1.442695
    %v264 = vpow.pop %v263
    %v265 = vmul.f32 %v258, 1.442695
    %v266 = vpow.pop %v265
    %v267 = vadd.f32 %v260, 1.0
    %v268 = vadd.f32 %v262, 1.0
    %v269 = vadd.f32 %v264, 1.0
    %v270 = vadd.f32 %v266, 1.0
    %v271 = vrcp.pop %v267
    %v272 = vmul.f32 %v267, %v271
    %v273 = vsub.f32 1.0, %v272
    %v274 = vmul.f32 %v271, %v273
    %v275 = vadd.f32 %v271, %v274
    %vm276 = vweird.f32 %v267
    %vm277 = vweird.f32 %v271
    %vm278 = vmor %vm276, %vm277
    %v279 = vsel %vm278, %v271, %v275
    %v280 = vand.u32 2147483647, %v267
    %vm281 = vcmp.eq.f32.partialorder %v280, 8.507059e+37
    %v282 = vand.u32 %v267, 2147483648
    %v283 = vor.u32 1.1754944e-38, %v282
    %v284 = vsel %vm281, %v283, %v279
    %v285 = vmul.f32 1.0, %v284
    %v286 = vrcp.pop %v268
    %v287 = vmul.f32 %v268, %v286
    %v288 = vsub.f32 1.0, %v287
    %v289 = vmul.f32 %v286, %v288
    %v290 = vadd.f32 %v286, %v289
    %vm291 = vweird.f32 %v268
    %vm292 = vweird.f32 %v286
    %vm293 = vmor %vm291, %vm292
    %v294 = vsel %vm293, %v286, %v290
    %v295 = vand.u32 2147483647, %v268
    %vm296 = vcmp.eq.f32.partialorder %v295, 8.507059e+37
    %v297 = vand.u32 %v268, 2147483648
    %v298 = vor.u32 1.1754944e-38, %v297
    %v299 = vsel %vm296, %v298, %v294
    %v300 = vmul.f32 1.0, %v299
    %v301 = vrcp.pop %v269
    %v302 = vmul.f32 %v269, %v301
    %v303 = vsub.f32 1.0, %v302
    %v304 = vmul.f32 %v301, %v303
    %v305 = vadd.f32 %v301, %v304
    %vm306 = vweird.f32 %v269
    %vm307 = vweird.f32 %v301
    %vm308 = vmor %vm306, %vm307
    %v309 = vsel %vm308, %v301, %v305
    %v310 = vand.u32 2147483647, %v269
    %vm311 = vcmp.eq.f32.partialorder %v310, 8.507059e+37
    %v312 = vand.u32 %v269, 2147483648
    %v313 = vor.u32 1.1754944e-38, %v312
    %v314 = vsel %vm311, %v313, %v309
    %v315 = vmul.f32 1.0, %v314
    %v316 = vrcp.pop %v270
    %v317 = vmul.f32 %v270, %v316
    %v318 = vsub.f32 1.0, %v317
    %v319 = vmul.f32 %v316, %v318
    %v320 = vadd.f32 %v316, %v319
    %vm321 = vweird.f32 %v270
    %vm322 = vweird.f32 %v316
    %vm323 = vmor %vm321, %vm322
    %v324 = vsel %vm323, %v316, %v320
    %v325 = vand.u32 2147483647, %v270
    %vm326 = vcmp.eq.f32.partialorder %v325, 8.507059e+37
    %v327 = vand.u32 %v270, 2147483648
    %v328 = vor.u32 1.1754944e-38, %v327
    %v329 = vsel %vm326, %v328, %v324
    %v330 = vmul.f32 1.0, %v329
    %v331 = vtanh.pop %v251
    %v332 = vtanh.pop %v252
    %v333 = vtanh.pop %v253
    %v334 = vtanh.pop %v254
    %v335 = vmul.f32 %v285, 0.0
    %v336 = vmul.f32 %v300, 0.0
    %v337 = vmul.f32 %v315, 0.0
    %v338 = vmul.f32 %v330, 0.0
    %343 = vrot.lane.b32.xlu0 %v331, 96
    %v344 = vpop.permute.xlu0 %343
    %345 = vrot.lane.b32.xlu0 %v332, 96
    %v346 = vpop.permute.xlu0 %345
    %347 = vrot.lane.b32.xlu0 %v333, 96
    %v348 = vpop.permute.xlu0 %347
    %349 = vrot.lane.b32.xlu0 %v334, 96
    %v350 = vpop.permute.xlu0 %349
    %v355 = vmul.f32 %v285, %v344
    %v356 = vmul.f32 %v300, %v346
    %v357 = vmul.f32 %v315, %v348
    %v358 = vmul.f32 %v330, %v350
    %363 = vrot.lane.b32.xlu0 %v355, 16
    %v364 = vpop.permute.xlu0 %363
    %365 = vrot.lane.b32.xlu0 %v356, 16
    %v366 = vpop.permute.xlu0 %365
    %367 = vrot.lane.b32.xlu0 %v357, 16
    %v368 = vpop.permute.xlu0 %367
    %369 = vrot.lane.b32.xlu0 %v358, 16
    %v370 = vpop.permute.xlu0 %369
    %v375 = vadd.f32 %v335, %v364
    %v376 = vadd.f32 %v336, %v366
    %v377 = vadd.f32 %v337, %v368
    %v378 = vadd.f32 %v338, %v370
    %v379 = vtanh.pop %v375
    %v380 = vtanh.pop %v376
    %v381 = vtanh.pop %v377
    %v382 = vtanh.pop %v378
    %387 = vrot.lane.b32.xlu0 %v379, 32
    %v388 = vpop.permute.xlu0 %387
    %389 = vrot.lane.b32.xlu0 %v380, 32
    %v390 = vpop.permute.xlu0 %389
    %391 = vrot.lane.b32.xlu0 %v381, 32
    %v392 = vpop.permute.xlu0 %391
    %393 = vrot.lane.b32.xlu0 %v382, 32
    %v394 = vpop.permute.xlu0 %393
    %v399 = vmul.f32 %v285, %v388
    %v400 = vmul.f32 %v300, %v390
    %v401 = vmul.f32 %v315, %v392
    %v402 = vmul.f32 %v330, %v394
    %v403 = vld [vmem:[%s6] sm:$0xff]
    %v404 = vld [vmem:[%s6 + $0x8] sm:$0xff]
    %s405 = scalar_lea.vmem %s6, 16
    %v406 = vld [vmem:[%s405] sm:$0xff]
    %v407 = vld [vmem:[%s405 + $0x8] sm:$0xff]
    %410 = vrot.lane.b32.xlu0 %v401, 80
    %v411 = vpop.permute.xlu0 %410
    %412 = vrot.lane.b32.xlu0 %v402, 80
    %v413 = vpop.permute.xlu0 %412
    %v414 = vsel %vm159, %v411, 0
    %v416 = vsel %vm159, %v413, 0
    %418 = vmatpush.msra.mxu0 0.0
    %419 = vmatpush.msra.mxu0 0.0
    %420 = vmatpush.msra.mxu0 0.0
    %421 = vmatpush.msra.mxu0 0.0
    %422 = vmatpush.msra.mxu0 0.0
    %423 = vmatpush.msra.mxu0 0.0
    %424 = vmatpush.msra.mxu0 0.0
    %425 = vmatpush.msra.mxu0 0.0
    %426 = vmatpush.msra.mxu0 0.0
    %427 = vmatpush.msra.mxu0 0.0
    %428 = vmatpush.msra.mxu0 0.0
    %429 = vmatpush.msra.mxu0 0.0
    %430 = vmatpush.msra.mxu0 0.0
    %431 = vmatpush.msra.mxu0 0.0
    %432 = vmatpush.msra.mxu0 %v407
    %433 = vmatpush.msra.mxu0 %v406
    %434 = vmatmul.f32.gmra.mxu0 %v414
    %v435 = vpop.f32.mrf.mxu0
    %v436 = vadd.f32 0.0, %v435
    %437 = vmatmul.f32.gmra.mxu0 %v416
    %v438 = vpop.f32.mrf.mxu0
    %v439 = vadd.f32 0.0, %v438
    %440 = vdwg.mxu0
    %443 = vrot.lane.b32.xlu0 %v399, 80
    %v444 = vpop.permute.xlu0 %443
    %445 = vrot.lane.b32.xlu0 %v400, 80
    %v446 = vpop.permute.xlu0 %445
    %v447 = vsel %vm159, %v444, 0
    %v449 = vsel %vm159, %v446, 0
    %451 = vmatpush.msra.mxu0 0.0
    %452 = vmatpush.msra.mxu0 0.0
    %453 = vmatpush.msra.mxu0 0.0
    %454 = vmatpush.msra.mxu0 0.0
    %455 = vmatpush.msra.mxu0 0.0
    %456 = vmatpush.msra.mxu0 0.0
    %457 = vmatpush.msra.mxu0 0.0
    %458 = vmatpush.msra.mxu0 0.0
    %459 = vmatpush.msra.mxu0 0.0
    %460 = vmatpush.msra.mxu0 0.0
    %461 = vmatpush.msra.mxu0 0.0
    %462 = vmatpush.msra.mxu0 0.0
    %463 = vmatpush.msra.mxu0 0.0
    %464 = vmatpush.msra.mxu0 0.0
    %465 = vmatpush.msra.mxu0 %v404
    %466 = vmatpush.msra.mxu0 %v403
    %467 = vmatmul.f32.gmra.mxu0 %v447
    %v468 = vpop.f32.mrf.mxu0
    %v469 = vadd.f32 %v436, %v468
    %470 = vmatmul.f32.gmra.mxu0 %v449
    %v471 = vpop.f32.mrf.mxu0
    %v472 = vadd.f32 %v439, %v471
    %473 = vdwg.mxu0
    %474 = vmatpush.msra.mxu0 0.0
    %475 = vmatpush.msra.mxu0 0.0
    %476 = vmatpush.msra.mxu0 0.0
    %477 = vmatpush.msra.mxu0 0.0
    %478 = vmatpush.msra.mxu0 0.0
    %479 = vmatpush.msra.mxu0 0.0
    %480 = vmatpush.msra.mxu0 0.0
    %481 = vmatpush.msra.mxu0 0.0
    %482 = vmatpush.msra.mxu0 0.0
    %483 = vmatpush.msra.mxu0 0.0
    %484 = vmatpush.msra.mxu0 0.0
    %485 = vmatpush.msra.mxu0 0.0
    %486 = vmatpush.msra.mxu0 0.0
    %487 = vmatpush.msra.mxu0 0.0
    %488 = vmatpush.msra.mxu0 %v218
    %489 = vmatpush.msra.mxu0 %v217
    %490 = vmatmul.f32.gmra.mxu0 %v447
    %v491 = vpop.f32.mrf.mxu0
    %v492 = vadd.f32 0.0, %v491
    %493 = vmatmul.f32.gmra.mxu0 %v449
    %v494 = vpop.f32.mrf.mxu0
    %v495 = vadd.f32 0.0, %v494
    %496 = vmatmul.f32.gmra.mxu0 %v414
    %v497 = vpop.f32.mrf.mxu0
    %v498 = vadd.f32 0.0, %v497
    %499 = vmatmul.f32.gmra.mxu0 %v416
    %v500 = vpop.f32.mrf.mxu0
    %v501 = vadd.f32 0.0, %v500
    %502 = vdwg.mxu0
    %v503 = vadd.f32 %v200, %v492
    %v504 = vadd.f32 %v203, %v495
    %v505 = vadd.f32 %v212, %v498
    %v506 = vadd.f32 %v215, %v501
    %v507 = vxor.u32 %v503, 2147483648
    %v508 = vxor.u32 %v504, 2147483648
    %v509 = vxor.u32 %v505, 2147483648
    %v510 = vxor.u32 %v506, 2147483648
    %v511 = vmul.f32 %v507, 1.442695
    %v512 = vpow.pop %v511
    %v513 = vmul.f32 %v508, 1.442695
    %v514 = vpow.pop %v513
    %v515 = vmul.f32 %v509, 1.442695
    %v516 = vpow.pop %v515
    %v517 = vmul.f32 %v510, 1.442695
    %v518 = vpow.pop %v517
    %v519 = vadd.f32 %v512, 1.0
    %v520 = vadd.f32 %v514, 1.0
    %v521 = vadd.f32 %v516, 1.0
    %v522 = vadd.f32 %v518, 1.0
    %v523 = vrcp.pop %v519
    %v524 = vmul.f32 %v519, %v523
    %v525 = vsub.f32 1.0, %v524
    %v526 = vmul.f32 %v523, %v525
    %v527 = vadd.f32 %v523, %v526
    %vm528 = vweird.f32 %v519
    %vm529 = vweird.f32 %v523
    %vm530 = vmor %vm528, %vm529
    %v531 = vsel %vm530, %v523, %v527
    %v532 = vand.u32 2147483647, %v519
    %vm533 = vcmp.eq.f32.partialorder %v532, 8.507059e+37
    %v534 = vand.u32 %v519, 2147483648
    %v535 = vor.u32 1.1754944e-38, %v534
    %v536 = vsel %vm533, %v535, %v531
    %v537 = vmul.f32 1.0, %v536
    %v538 = vrcp.pop %v520
    %v539 = vmul.f32 %v520, %v538
    %v540 = vsub.f32 1.0, %v539
    %v541 = vmul.f32 %v538, %v540
    %v542 = vadd.f32 %v538, %v541
    %vm543 = vweird.f32 %v520
    %vm544 = vweird.f32 %v538
    %vm545 = vmor %vm543, %vm544
    %v546 = vsel %vm545, %v538, %v542
    %v547 = vand.u32 2147483647, %v520
    %vm548 = vcmp.eq.f32.partialorder %v547, 8.507059e+37
    %v549 = vand.u32 %v520, 2147483648
    %v550 = vor.u32 1.1754944e-38, %v549
    %v551 = vsel %vm548, %v550, %v546
    %v552 = vmul.f32 1.0, %v551
    %v553 = vrcp.pop %v521
    %v554 = vmul.f32 %v521, %v553
    %v555 = vsub.f32 1.0, %v554
    %v556 = vmul.f32 %v553, %v555
    %v557 = vadd.f32 %v553, %v556
    %vm558 = vweird.f32 %v521
    %vm559 = vweird.f32 %v553
    %vm560 = vmor %vm558, %vm559
    %v561 = vsel %vm560, %v553, %v557
    %v562 = vand.u32 2147483647, %v521
    %vm563 = vcmp.eq.f32.partialorder %v562, 8.507059e+37
    %v564 = vand.u32 %v521, 2147483648
    %v565 = vor.u32 1.1754944e-38, %v564
    %v566 = vsel %vm563, %v565, %v561
    %v567 = vmul.f32 1.0, %v566
    %v568 = vrcp.pop %v522
    %v569 = vmul.f32 %v522, %v568
    %v570 = vsub.f32 1.0, %v569
    %v571 = vmul.f32 %v568, %v570
    %v572 = vadd.f32 %v568, %v571
    %vm573 = vweird.f32 %v522
    %vm574 = vweird.f32 %v568
    %vm575 = vmor %vm573, %vm574
    %v576 = vsel %vm575, %v568, %v572
    %v577 = vand.u32 2147483647, %v522
    %vm578 = vcmp.eq.f32.partialorder %v577, 8.507059e+37
    %v579 = vand.u32 %v522, 2147483648
    %v580 = vor.u32 1.1754944e-38, %v579
    %v581 = vsel %vm578, %v580, %v576
    %v582 = vmul.f32 1.0, %v581
    %v583 = vtanh.pop %v503
    %v584 = vtanh.pop %v504
    %v585 = vtanh.pop %v505
    %v586 = vtanh.pop %v506
    %v587 = vmul.f32 %v537, %v375
    %v588 = vmul.f32 %v552, %v376
    %v589 = vmul.f32 %v567, %v377
    %v590 = vmul.f32 %v582, %v378
    %595 = vrot.lane.b32.xlu0 %v583, 96
    %v596 = vpop.permute.xlu0 %595
    %597 = vrot.lane.b32.xlu0 %v584, 96
    %v598 = vpop.permute.xlu0 %597
    %599 = vrot.lane.b32.xlu0 %v585, 96
    %v600 = vpop.permute.xlu0 %599
    %601 = vrot.lane.b32.xlu0 %v586, 96
    %v602 = vpop.permute.xlu0 %601
    %v607 = vmul.f32 %v537, %v596
    %v608 = vmul.f32 %v552, %v598
    %v609 = vmul.f32 %v567, %v600
    %v610 = vmul.f32 %v582, %v602
    %615 = vrot.lane.b32.xlu0 %v607, 16
    %v616 = vpop.permute.xlu0 %615
    %617 = vrot.lane.b32.xlu0 %v608, 16
    %v618 = vpop.permute.xlu0 %617
    %619 = vrot.lane.b32.xlu0 %v609, 16
    %v620 = vpop.permute.xlu0 %619
    %621 = vrot.lane.b32.xlu0 %v610, 16
    %v622 = vpop.permute.xlu0 %621
    %v627 = vadd.f32 %v587, %v616
    %v628 = vadd.f32 %v588, %v618
    %v629 = vadd.f32 %v589, %v620
    %v630 = vadd.f32 %v590, %v622
    %v631 = vtanh.pop %v627
    %v632 = vtanh.pop %v628
    %v633 = vtanh.pop %v629
    %v634 = vtanh.pop %v630
    %639 = vrot.lane.b32.xlu0 %v631, 32
    %v640 = vpop.permute.xlu0 %639
    %641 = vrot.lane.b32.xlu0 %v632, 32
    %v642 = vpop.permute.xlu0 %641
    %643 = vrot.lane.b32.xlu0 %v633, 32
    %v644 = vpop.permute.xlu0 %643
    %645 = vrot.lane.b32.xlu0 %v634, 32
    %v646 = vpop.permute.xlu0 %645
    %v651 = vmul.f32 %v537, %v640
    %v652 = vmul.f32 %v552, %v642
    %v653 = vmul.f32 %v567, %v644
    %v654 = vmul.f32 %v582, %v646
    %657 = vrot.lane.b32.xlu0 %v653, 80
    %v658 = vpop.permute.xlu0 %657
    %659 = vrot.lane.b32.xlu0 %v654, 80
    %v660 = vpop.permute.xlu0 %659
    %v661 = vsel %vm159, %v658, 0
    %v663 = vsel %vm159, %v660, 0
    %665 = vmatpush.msra.mxu0 0.0
    %666 = vmatpush.msra.mxu0 0.0
    %667 = vmatpush.msra.mxu0 0.0
    %668 = vmatpush.msra.mxu0 0.0
    %669 = vmatpush.msra.mxu0 0.0
    %670 = vmatpush.msra.mxu0 0.0
    %671 = vmatpush.msra.mxu0 0.0
    %672 = vmatpush.msra.mxu0 0.0
    %673 = vmatpush.msra.mxu0 0.0
    %674 = vmatpush.msra.mxu0 0.0
    %675 = vmatpush.msra.mxu0 0.0
    %676 = vmatpush.msra.mxu0 0.0
    %677 = vmatpush.msra.mxu0 0.0
    %678 = vmatpush.msra.mxu0 0.0
    %679 = vmatpush.msra.mxu0 %v407
    %680 = vmatpush.msra.mxu0 %v406
    %681 = vmatmul.f32.gmra.mxu0 %v661
    %v682 = vpop.f32.mrf.mxu0
    %v683 = vadd.f32 0.0, %v682
    %684 = vmatmul.f32.gmra.mxu0 %v663
    %v685 = vpop.f32.mrf.mxu0
    %v686 = vadd.f32 0.0, %v685
    %687 = vdwg.mxu0
    %690 = vrot.lane.b32.xlu0 %v651, 80
    %v691 = vpop.permute.xlu0 %690
    %692 = vrot.lane.b32.xlu0 %v652, 80
    %v693 = vpop.permute.xlu0 %692
    %v694 = vsel %vm159, %v691, 0
    %v696 = vsel %vm159, %v693, 0
    %698 = vmatpush.msra.mxu0 0.0
    %699 = vmatpush.msra.mxu0 0.0
    %700 = vmatpush.msra.mxu0 0.0
    %701 = vmatpush.msra.mxu0 0.0
    %702 = vmatpush.msra.mxu0 0.0
    %703 = vmatpush.msra.mxu0 0.0
    %704 = vmatpush.msra.mxu0 0.0
    %705 = vmatpush.msra.mxu0 0.0
    %706 = vmatpush.msra.mxu0 0.0
    %707 = vmatpush.msra.mxu0 0.0
    %708 = vmatpush.msra.mxu0 0.0
    %709 = vmatpush.msra.mxu0 0.0
    %710 = vmatpush.msra.mxu0 0.0
    %711 = vmatpush.msra.mxu0 0.0
    %712 = vmatpush.msra.mxu0 %v404
    %713 = vmatpush.msra.mxu0 %v403
    %714 = vmatmul.f32.gmra.mxu0 %v694
    %v715 = vpop.f32.mrf.mxu0
    %v716 = vadd.f32 %v683, %v715
    %717 = vmatmul.f32.gmra.mxu0 %v696
    %v718 = vpop.f32.mrf.mxu0
    %v719 = vadd.f32 %v686, %v718
    %720 = vdwg.mxu0
    %v721 = vld [vmem:[%s7] sm:$0xff]
    %v722 = vld [vmem:[%s7 + $0x8] sm:$0xff]
    %v723 = vld [vmem:[%s7 + $0x10] sm:$0xff]
    %v724 = vld [vmem:[%s7 + $0x18] sm:$0xff]
    %v725 = vld [vmem:[%s8] sm:$0x1]
    %v727 = vperm.slane %v725, 0
    %vm729 = vcmask 261120
    %v731 = vsel %vm729, %v469, 0
    %v734 = vsel %vm729, %v472, 0
    %v737 = vsel %vm729, %v716, 0
    %v740 = vsel %vm729, %v719, 0
    %742 = vmatpush.msra.mxu0 0.0
    %743 = vmatpush.msra.mxu0 0.0
    %744 = vmatpush.msra.mxu0 0.0
    %745 = vmatpush.msra.mxu0 0.0
    %746 = vmatpush.msra.mxu0 0.0
    %747 = vmatpush.msra.mxu0 0.0
    %748 = vmatpush.msra.mxu0 0.0
    %749 = vmatpush.msra.mxu0 0.0
    %750 = vmatpush.msra.mxu0 0.0
    %751 = vmatpush.msra.mxu0 0.0
    %752 = vmatpush.msra.mxu0 0.0
    %753 = vmatpush.msra.mxu0 0.0
    %754 = vmatpush.msra.mxu0 %v724
    %755 = vmatpush.msra.mxu0 %v723
    %756 = vmatpush.msra.mxu0 %v722
    %757 = vmatpush.msra.mxu0 %v721
    %758 = vmatmul.f32.gmra.mxu0 %v731
    %v759 = vpop.f32.mrf.mxu0
    %v760 = vadd.f32 %v727, %v759
    %761 = vmatmul.f32.gmra.mxu0 %v734
    %v762 = vpop.f32.mrf.mxu0
    %v763 = vadd.f32 %v727, %v762
    %764 = vmatmul.f32.gmra.mxu0 %v737
    %v765 = vpop.f32.mrf.mxu0
    %v766 = vadd.f32 %v727, %v765
    %767 = vmatmul.f32.gmra.mxu0 %v740
    %v768 = vpop.f32.mrf.mxu0
    %v769 = vadd.f32 %v727, %v768
    %770 = vdwg.mxu0
    %v771 = vld [vmem:[%s19] sm:$0xff]
    %v772 = vld [vmem:[%s19 + $0x8] sm:$0xff]
    %v773 = vld [vmem:[%s19 + $0x10] sm:$0xff]
    %v774 = vld [vmem:[%s19 + $0x18] sm:$0xff]
    %v775 = vld [vmem:[%s20] sm:$0xf]
    %778 = vrot.lane.b32.xlu0 %v760, 96
    %v779 = vpop.permute.xlu0 %778
    %780 = vrot.lane.b32.xlu0 %v763, 96
    %v781 = vpop.permute.xlu0 %780
    %v784 = vmul.f32 %v760, %v779
    %v785 = vmul.f32 %v763, %v781
    %v786 = vmul.f32 %v766, %v779
    %v787 = vmul.f32 %v769, %v781
    %v789 = vsel %vm729, %v784, 0
    %v792 = vsel %vm729, %v785, 0
    %v795 = vsel %vm729, %v786, 0
    %v798 = vsel %vm729, %v787, 0
    %800 = vmatpush.msra.mxu0 0.0
    %801 = vmatpush.msra.mxu0 0.0
    %802 = vmatpush.msra.mxu0 0.0
    %803 = vmatpush.msra.mxu0 0.0
    %804 = vmatpush.msra.mxu0 0.0
    %805 = vmatpush.msra.mxu0 0.0
    %806 = vmatpush.msra.mxu0 0.0
    %807 = vmatpush.msra.mxu0 0.0
    %808 = vmatpush.msra.mxu0 0.0
    %809 = vmatpush.msra.mxu0 0.0
    %810 = vmatpush.msra.mxu0 0.0
    %811 = vmatpush.msra.mxu0 0.0
    %812 = vmatpush.msra.mxu0 %v774
    %813 = vmatpush.msra.mxu0 %v773
    %814 = vmatpush.msra.mxu0 %v772
    %815 = vmatpush.msra.mxu0 %v771
    %816 = vmatmul.f32.gmra.mxu0 %v789
    %v817 = vpop.f32.mrf.mxu0
    %v818 = vadd.f32 0.0, %v817
    %819 = vmatmul.f32.gmra.mxu0 %v792
    %v820 = vpop.f32.mrf.mxu0
    %v821 = vadd.f32 0.0, %v820
    %822 = vmatmul.f32.gmra.mxu0 %v795
    %v823 = vpop.f32.mrf.mxu0
    %v824 = vadd.f32 0.0, %v823
    %825 = vmatmul.f32.gmra.mxu0 %v798
    %v826 = vpop.f32.mrf.mxu0
    %v827 = vadd.f32 0.0, %v826
    %828 = vdwg.mxu0
    %v829 = vmul.f32 %v818, 0.35355338
    %v830 = vmul.f32 %v821, 0.35355338
    %v831 = vmul.f32 %v824, 0.35355338
    %v832 = vmul.f32 %v827, 0.35355338
    %835 = vrot.lane.b32.xlu0 %v766, 96
    %v836 = vpop.permute.xlu0 %835
    %837 = vrot.lane.b32.xlu0 %v769, 96
    %v838 = vpop.permute.xlu0 %837
    %v841 = vmul.f32 %v760, %v836
    %v842 = vmul.f32 %v763, %v838
    %v843 = vmul.f32 %v766, %v836
    %v844 = vmul.f32 %v769, %v838
    %v846 = vsel %vm729, %v841, 0
    %v849 = vsel %vm729, %v842, 0
    %v852 = vsel %vm729, %v843, 0
    %v855 = vsel %vm729, %v844, 0
    %857 = vmatpush.msra.mxu0 0.0
    %858 = vmatpush.msra.mxu0 0.0
    %859 = vmatpush.msra.mxu0 0.0
    %860 = vmatpush.msra.mxu0 0.0
    %861 = vmatpush.msra.mxu0 0.0
    %862 = vmatpush.msra.mxu0 0.0
    %863 = vmatpush.msra.mxu0 0.0
    %864 = vmatpush.msra.mxu0 0.0
    %865 = vmatpush.msra.mxu0 0.0
    %866 = vmatpush.msra.mxu0 0.0
    %867 = vmatpush.msra.mxu0 0.0
    %868 = vmatpush.msra.mxu0 0.0
    %869 = vmatpush.msra.mxu0 %v774
    %870 = vmatpush.msra.mxu0 %v773
    %871 = vmatpush.msra.mxu0 %v772
    %872 = vmatpush.msra.mxu0 %v771
    %873 = vmatmul.f32.gmra.mxu0 %v846
    %v874 = vpop.f32.mrf.mxu0
    %v875 = vadd.f32 0.0, %v874
    %876 = vmatmul.f32.gmra.mxu0 %v849
    %v877 = vpop.f32.mrf.mxu0
    %v878 = vadd.f32 0.0, %v877
    %879 = vmatmul.f32.gmra.mxu0 %v852
    %v880 = vpop.f32.mrf.mxu0
    %v881 = vadd.f32 0.0, %v880
    %882 = vmatmul.f32.gmra.mxu0 %v855
    %v883 = vpop.f32.mrf.mxu0
    %v884 = vadd.f32 0.0, %v883
    %885 = vdwg.mxu0
    %v886 = vmul.f32 %v875, 0.35355338
    %v887 = vmul.f32 %v878, 0.35355338
    %v888 = vmul.f32 %v881, 0.35355338
    %v889 = vmul.f32 %v884, 0.35355338
    %v890 = vmax.f32 %v829, %v886
    %v891 = vmax.f32 %v830, %v887
    %v892 = vmax.f32 %v831, %v888
    %v893 = vmax.f32 %v832, %v889
    %v894 = vsub.f32 %v829, %v890
    %v895 = vsub.f32 %v830, %v891
    %v896 = vsub.f32 %v831, %v892
    %v897 = vsub.f32 %v832, %v893
    %v898 = vmul.f32 %v894, 1.442695
    %v899 = vpow.pop %v898
    %v900 = vmul.f32 %v895, 1.442695
    %v901 = vpow.pop %v900
    %v902 = vmul.f32 %v896, 1.442695
    %v903 = vpow.pop %v902
    %v904 = vmul.f32 %v897, 1.442695
    %v905 = vpow.pop %v904
    %v906 = vsub.f32 %v886, %v890
    %v907 = vsub.f32 %v887, %v891
    %v908 = vsub.f32 %v888, %v892
    %v909 = vsub.f32 %v889, %v893
    %v910 = vmul.f32 %v906, 1.442695
    %v911 = vpow.pop %v910
    %v912 = vmul.f32 %v907, 1.442695
    %v913 = vpow.pop %v912
    %v914 = vmul.f32 %v908, 1.442695
    %v915 = vpow.pop %v914
    %v916 = vmul.f32 %v909, 1.442695
    %v917 = vpow.pop %v916
    %v918 = vadd.f32 %v899, %v911
    %v919 = vadd.f32 %v901, %v913
    %v920 = vadd.f32 %v903, %v915
    %v921 = vadd.f32 %v905, %v917
    %v922 = vrcp.pop %v918
    %v923 = vrcp.pop %v919
    %v924 = vrcp.pop %v920
    %v925 = vrcp.pop %v921
    %v926 = vmul.f32 %v899, %v922
    %v927 = vmul.f32 %v901, %v923
    %v928 = vmul.f32 %v903, %v924
    %v929 = vmul.f32 %v905, %v925
    %v931 = vsel %vm95, %v926, 0
    %v934 = vsel %vm95, %v927, 0
    %v937 = vsel %vm95, %v928, 0
    %v940 = vsel %vm95, %v929, 0
    %v943 = vsel %vm108, %v775, 0
    %945 = vmatpush.msra.mxu0 0.0
    %946 = vmatpush.msra.mxu0 0.0
    %947 = vmatpush.msra.mxu0 0.0
    %948 = vmatpush.msra.mxu0 0.0
    %949 = vmatpush.msra.mxu0 0.0
    %950 = vmatpush.msra.mxu0 0.0
    %951 = vmatpush.msra.mxu0 0.0
    %952 = vmatpush.msra.mxu0 0.0
    %953 = vmatpush.msra.mxu0 0.0
    %954 = vmatpush.msra.mxu0 0.0
    %955 = vmatpush.msra.mxu0 0.0
    %956 = vmatpush.msra.mxu0 0.0
    %957 = vmatpush.msra.mxu0 0.0
    %958 = vmatpush.msra.mxu0 0.0
    %959 = vmatpush.msra.mxu0 0.0
    %960 = vmatpush.msra.mxu0 %v943
    %961 = vmatmul.f32.gmra.mxu0 %v931
    %v962 = vpop.f32.mrf.mxu0
    %v963 = vadd.f32 0.0, %v962
    %964 = vmatmul.f32.gmra.mxu0 %v934
    %v965 = vpop.f32.mrf.mxu0
    %v966 = vadd.f32 0.0, %v965
    %967 = vmatmul.f32.gmra.mxu0 %v937
    %v968 = vpop.f32.mrf.mxu0
    %v969 = vadd.f32 0.0, %v968
    %970 = vmatmul.f32.gmra.mxu0 %v940
    %v971 = vpop.f32.mrf.mxu0
    %v972 = vadd.f32 0.0, %v971
    %973 = vdwg.mxu0
    %974 = vrot.lane.b32.xlu0 %v760, 64
    %v975 = vpop.permute.xlu0 %974
    %976 = vrot.lane.b32.xlu0 %v763, 64
    %v977 = vpop.permute.xlu0 %976
    %v980 = vmul.f32 %v963, %v975
    %v981 = vmul.f32 %v966, %v977
    %v982 = vmul.f32 %v969, %v975
    %v983 = vmul.f32 %v972, %v977
    %v984 = vmul.f32 %v911, %v922
    %v985 = vmul.f32 %v913, %v923
    %v986 = vmul.f32 %v915, %v924
    %v987 = vmul.f32 %v917, %v925
    %v989 = vsel %vm95, %v984, 0
    %v992 = vsel %vm95, %v985, 0
    %v995 = vsel %vm95, %v986, 0
    %v998 = vsel %vm95, %v987, 0
    %1000 = vmatpush.msra.mxu0 0.0
    %1001 = vmatpush.msra.mxu0 0.0
    %1002 = vmatpush.msra.mxu0 0.0
    %1003 = vmatpush.msra.mxu0 0.0
    %1004 = vmatpush.msra.mxu0 0.0
    %1005 = vmatpush.msra.mxu0 0.0
    %1006 = vmatpush.msra.mxu0 0.0
    %1007 = vmatpush.msra.mxu0 0.0
    %1008 = vmatpush.msra.mxu0 0.0
    %1009 = vmatpush.msra.mxu0 0.0
    %1010 = vmatpush.msra.mxu0 0.0
    %1011 = vmatpush.msra.mxu0 0.0
    %1012 = vmatpush.msra.mxu0 0.0
    %1013 = vmatpush.msra.mxu0 0.0
    %1014 = vmatpush.msra.mxu0 0.0
    %1015 = vmatpush.msra.mxu0 %v943
    %1016 = vmatmul.f32.gmra.mxu0 %v989
    %v1017 = vpop.f32.mrf.mxu0
    %v1018 = vadd.f32 0.0, %v1017
    %1019 = vmatmul.f32.gmra.mxu0 %v992
    %v1020 = vpop.f32.mrf.mxu0
    %v1021 = vadd.f32 0.0, %v1020
    %1022 = vmatmul.f32.gmra.mxu0 %v995
    %v1023 = vpop.f32.mrf.mxu0
    %v1024 = vadd.f32 0.0, %v1023
    %1025 = vmatmul.f32.gmra.mxu0 %v998
    %v1026 = vpop.f32.mrf.mxu0
    %v1027 = vadd.f32 0.0, %v1026
    %1028 = vdwg.mxu0
    %1029 = vrot.lane.b32.xlu0 %v766, 64
    %v1030 = vpop.permute.xlu0 %1029
    %1031 = vrot.lane.b32.xlu0 %v769, 64
    %v1032 = vpop.permute.xlu0 %1031
    %v1035 = vmul.f32 %v1018, %v1030
    %v1036 = vmul.f32 %v1021, %v1032
    %v1037 = vmul.f32 %v1024, %v1030
    %v1038 = vmul.f32 %v1027, %v1032
    %v1039 = vadd.f32 %v980, %v1035
    %v1040 = vadd.f32 %v981, %v1036
    %v1041 = vadd.f32 %v982, %v1037
    %v1042 = vadd.f32 %v983, %v1038
    %v1043 = vld [vmem:[%s9] sm:$0xff]
    %v1044 = vld [vmem:[%s9 + $0x8] sm:$0xff]
    %v1045 = vld [vmem:[%s9 + $0x10] sm:$0xff]
    %v1046 = vld [vmem:[%s9 + $0x18] sm:$0xff]
    %v1047 = vld [vmem:[%s10] sm:$0x1]
    %v1049 = vperm.slane %v1047, 0
    %v1052 = vsel %vm729, %v1039, 0
    %v1055 = vsel %vm729, %v1040, 0
    %v1058 = vsel %vm729, %v1041, 0
    %v1061 = vsel %vm729, %v1042, 0
    %1063 = vmatpush.msra.mxu0 0.0
    %1064 = vmatpush.msra.mxu0 0.0
    %1065 = vmatpush.msra.mxu0 0.0
    %1066 = vmatpush.msra.mxu0 0.0
    %1067 = vmatpush.msra.mxu0 0.0
    %1068 = vmatpush.msra.mxu0 0.0
    %1069 = vmatpush.msra.mxu0 0.0
    %1070 = vmatpush.msra.mxu0 0.0
    %1071 = vmatpush.msra.mxu0 0.0
    %1072 = vmatpush.msra.mxu0 0.0
    %1073 = vmatpush.msra.mxu0 0.0
    %1074 = vmatpush.msra.mxu0 0.0
    %1075 = vmatpush.msra.mxu0 %v1046
    %1076 = vmatpush.msra.mxu0 %v1045
    %1077 = vmatpush.msra.mxu0 %v1044
    %1078 = vmatpush.msra.mxu0 %v1043
    %1079 = vmatmul.f32.gmra.mxu0 %v1052
    %v1080 = vpop.f32.mrf.mxu0
    %v1081 = vadd.f32 %v1049, %v1080
    %1082 = vmatmul.f32.gmra.mxu0 %v1055
    %v1083 = vpop.f32.mrf.mxu0
    %v1084 = vadd.f32 %v1049, %v1083
    %1085 = vmatmul.f32.gmra.mxu0 %v1058
    %v1086 = vpop.f32.mrf.mxu0
    %v1087 = vadd.f32 %v1049, %v1086
    %1088 = vmatmul.f32.gmra.mxu0 %v1061
    %v1089 = vpop.f32.mrf.mxu0
    %v1090 = vadd.f32 %v1049, %v1089
    %1091 = vdwg.mxu0
    %v1092 = vadd.f32 %v469, %v1081
    %v1093 = vadd.f32 %v472, %v1084
    %v1094 = vadd.f32 %v716, %v1087
    %v1095 = vadd.f32 %v719, %v1090
    %v1096 = vsel %vm729, %v1092, 0.0
    %1097 = vadd.xlane.f32.xlu0 %v1096
    %v1098 = vpop.xlane.xlu0 %1097
    %v1099 = vsel %vm729, %v1093, 0.0
    %1100 = vadd.xlane.f32.xlu0 %v1099
    %v1101 = vpop.xlane.xlu0 %1100
    %v1102 = vsel %vm729, %v1094, 0.0
    %1103 = vadd.xlane.f32.xlu0 %v1102
    %v1104 = vpop.xlane.xlu0 %1103
    %v1105 = vsel %vm729, %v1095, 0.0
    %1106 = vadd.xlane.f32.xlu0 %v1105
    %v1107 = vpop.xlane.xlu0 %1106
    %v1108 = vrcp.pop 32.0
    %v1109 = vmul.f32 32.0, %v1108
    %v1110 = vsub.f32 1.0, %v1109
    %v1111 = vmul.f32 %v1108, %v1110
    %v1112 = vadd.f32 %v1108, %v1111
    %vm1113 = vweird.f32 %v1108
    %v1114 = vsel %vm1113, %v1108, %v1112
    %v1115 = vmul.f32 %v1098, %v1114
    %v1116 = vmul.f32 %v1101, %v1114
    %v1117 = vmul.f32 %v1104, %v1114
    %v1118 = vmul.f32 %v1107, %v1114
    %v1119 = vsub.f32 %v1092, %v1115
    %v1120 = vsub.f32 %v1093, %v1116
    %v1121 = vsub.f32 %v1094, %v1117
    %v1122 = vsub.f32 %v1095, %v1118
    %v1123 = vmul.f32 %v1119, %v1119
    %v1124 = vmul.f32 %v1120, %v1120
    %v1125 = vmul.f32 %v1121, %v1121
    %v1126 = vmul.f32 %v1122, %v1122
    %v1127 = vsel %vm729, %v1123, 0.0
    %1128 = vadd.xlane.f32.xlu0 %v1127
    %v1129 = vpop.xlane.xlu0 %1128
    %v1130 = vsel %vm729, %v1124, 0.0
    %1131 = vadd.xlane.f32.xlu0 %v1130
    %v1132 = vpop.xlane.xlu0 %1131
    %v1133 = vsel %vm729, %v1125, 0.0
    %1134 = vadd.xlane.f32.xlu0 %v1133
    %v1135 = vpop.xlane.xlu0 %1134
    %v1136 = vsel %vm729, %v1126, 0.0
    %1137 = vadd.xlane.f32.xlu0 %v1136
    %v1138 = vpop.xlane.xlu0 %1137
    %v1139 = vmul.f32 %v1129, %v1114
    %v1140 = vmul.f32 %v1132, %v1114
    %v1141 = vmul.f32 %v1135, %v1114
    %v1142 = vmul.f32 %v1138, %v1114
    %v1143 = vadd.f32 %v1139, 1e-05
    %v1144 = vadd.f32 %v1140, 1e-05
    %v1145 = vadd.f32 %v1141, 1e-05
    %v1146 = vadd.f32 %v1142, 1e-05
    %v1147 = vrsqrt.pop %v1143
    %v1148 = vmul.f32 %v1147, %v1143
    %v1149 = vmul.f32 %v1148, %v1147
    %v1150 = vmul.f32 0.5, %v1149
    %v1151 = vsub.f32 1.5, %v1150
    %v1152 = vmul.f32 %v1147, %v1151
    %vm1153 = vweird.f32 %v1143
    %vm1154 = vweird.f32 %v1147
    %vm1155 = vmor %vm1153, %vm1154
    %v1156 = vsel %vm1155, %v1147, %v1152
    %v1157 = vrsqrt.pop %v1144
    %v1158 = vmul.f32 %v1157, %v1144
    %v1159 = vmul.f32 %v1158, %v1157
    %v1160 = vmul.f32 0.5, %v1159
    %v1161 = vsub.f32 1.5, %v1160
    %v1162 = vmul.f32 %v1157, %v1161
    %vm1163 = vweird.f32 %v1144
    %vm1164 = vweird.f32 %v1157
    %vm1165 = vmor %vm1163, %vm1164
    %v1166 = vsel %vm1165, %v1157, %v1162
    %v1167 = vrsqrt.pop %v1145
    %v1168 = vmul.f32 %v1167, %v1145
    %v1169 = vmul.f32 %v1168, %v1167
    %v1170 = vmul.f32 0.5, %v1169
    %v1171 = vsub.f32 1.5, %v1170
    %v1172 = vmul.f32 %v1167, %v1171
    %vm1173 = vweird.f32 %v1145
    %vm1174 = vweird.f32 %v1167
    %vm1175 = vmor %vm1173, %vm1174
    %v1176 = vsel %vm1175, %v1167, %v1172
    %v1177 = vrsqrt.pop %v1146
    %v1178 = vmul.f32 %v1177, %v1146
    %v1179 = vmul.f32 %v1178, %v1177
    %v1180 = vmul.f32 0.5, %v1179
    %v1181 = vsub.f32 1.5, %v1180
    %v1182 = vmul.f32 %v1177, %v1181
    %vm1183 = vweird.f32 %v1146
    %vm1184 = vweird.f32 %v1177
    %vm1185 = vmor %vm1183, %vm1184
    %v1186 = vsel %vm1185, %v1177, %v1182
    %v1187 = vmul.f32 %v1119, %v1156
    %v1188 = vmul.f32 %v1120, %v1166
    %v1189 = vmul.f32 %v1121, %v1176
    %v1190 = vmul.f32 %v1122, %v1186
    %v1191 = vld [vmem:[%s11] sm:$0x1]
    %v1193 = vperm.slane %v1191, 0
    %v1195 = vmul.f32 %v1187, %v1193
    %v1196 = vmul.f32 %v1188, %v1193
    %v1197 = vmul.f32 %v1189, %v1193
    %v1198 = vmul.f32 %v1190, %v1193
    %v1199 = vld [vmem:[%s12] sm:$0x1]
    %v1201 = vperm.slane %v1199, 0
    %v1203 = vadd.f32 %v1195, %v1201
    %v1204 = vadd.f32 %v1196, %v1201
    %v1205 = vadd.f32 %v1197, %v1201
    %v1206 = vadd.f32 %v1198, %v1201
    %v1207 = vld [vmem:[%s13] sm:$0xff]
    %v1208 = vld [vmem:[%s13 + $0x8] sm:$0xff]
    %v1209 = vld [vmem:[%s13 + $0x10] sm:$0xff]
    %v1210 = vld [vmem:[%s13 + $0x18] sm:$0xff]
    %v1211 = vld [vmem:[%s14] sm:$0x1]
    %v1213 = vperm.slane %v1211, 0
    %v1216 = vsel %vm729, %v1203, 0
    %v1219 = vsel %vm729, %v1204, 0
    %v1222 = vsel %vm729, %v1205, 0
    %v1225 = vsel %vm729, %v1206, 0
    %1227 = vmatpush.msra.mxu0 0.0
    %1228 = vmatpush.msra.mxu0 0.0
    %1229 = vmatpush.msra.mxu0 0.0
    %1230 = vmatpush.msra.mxu0 0.0
    %1231 = vmatpush.msra.mxu0 0.0
    %1232 = vmatpush.msra.mxu0 0.0
    %1233 = vmatpush.msra.mxu0 0.0
    %1234 = vmatpush.msra.mxu0 0.0
    %1235 = vmatpush.msra.mxu0 0.0
    %1236 = vmatpush.msra.mxu0 0.0
    %1237 = vmatpush.msra.mxu0 0.0
    %1238 = vmatpush.msra.mxu0 0.0
    %1239 = vmatpush.msra.mxu0 %v1210
    %1240 = vmatpush.msra.mxu0 %v1209
    %1241 = vmatpush.msra.mxu0 %v1208
    %1242 = vmatpush.msra.mxu0 %v1207
    %1243 = vmatmul.f32.gmra.mxu0 %v1216
    %v1244 = vpop.f32.mrf.mxu0
    %v1245 = vadd.f32 %v1213, %v1244
    %1246 = vmatmul.f32.gmra.mxu0 %v1219
    %v1247 = vpop.f32.mrf.mxu0
    %v1248 = vadd.f32 %v1213, %v1247
    %1249 = vmatmul.f32.gmra.mxu0 %v1222
    %v1250 = vpop.f32.mrf.mxu0
    %v1251 = vadd.f32 %v1213, %v1250
    %1252 = vmatmul.f32.gmra.mxu0 %v1225
    %v1253 = vpop.f32.mrf.mxu0
    %v1254 = vadd.f32 %v1213, %v1253
    %1255 = vdwg.mxu0
    %v1256 = vmax.f32 %v1245, 0.0
    %v1257 = vmax.f32 %v1248, 0.0
    %v1258 = vmax.f32 %v1251, 0.0
    %v1259 = vmax.f32 %v1254, 0.0
    %v1260 = vld [vmem:[%s15] sm:$0xff]
    %v1261 = vld [vmem:[%s15 + $0x8] sm:$0xff]
    %v1262 = vld [vmem:[%s15 + $0x10] sm:$0xff]
    %v1263 = vld [vmem:[%s15 + $0x18] sm:$0xff]
    %v1264 = vld [vmem:[%s16] sm:$0x1]
    %v1266 = vperm.slane %v1264, 0
    %v1269 = vsel %vm729, %v1256, 0
    %v1272 = vsel %vm729, %v1257, 0
    %v1275 = vsel %vm729, %v1258, 0
    %v1278 = vsel %vm729, %v1259, 0
    %1280 = vmatpush.msra.mxu0 0.0
    %1281 = vmatpush.msra.mxu0 0.0
    %1282 = vmatpush.msra.mxu0 0.0
    %1283 = vmatpush.msra.mxu0 0.0
    %1284 = vmatpush.msra.mxu0 0.0
    %1285 = vmatpush.msra.mxu0 0.0
    %1286 = vmatpush.msra.mxu0 0.0
    %1287 = vmatpush.msra.mxu0 0.0
    %1288 = vmatpush.msra.mxu0 0.0
    %1289 = vmatpush.msra.mxu0 0.0
    %1290 = vmatpush.msra.mxu0 0.0
    %1291 = vmatpush.msra.mxu0 0.0
    %1292 = vmatpush.msra.mxu0 %v1263
    %1293 = vmatpush.msra.mxu0 %v1262
    %1294 = vmatpush.msra.mxu0 %v1261
    %1295 = vmatpush.msra.mxu0 %v1260
    %1296 = vmatmul.f32.gmra.mxu0 %v1269
    %v1297 = vpop.f32.mrf.mxu0
    %v1298 = vadd.f32 %v1266, %v1297
    %1299 = vmatmul.f32.gmra.mxu0 %v1272
    %v1300 = vpop.f32.mrf.mxu0
    %v1301 = vadd.f32 %v1266, %v1300
    %1302 = vmatmul.f32.gmra.mxu0 %v1275
    %v1303 = vpop.f32.mrf.mxu0
    %v1304 = vadd.f32 %v1266, %v1303
    %1305 = vmatmul.f32.gmra.mxu0 %v1278
    %v1306 = vpop.f32.mrf.mxu0
    %v1307 = vadd.f32 %v1266, %v1306
    %1308 = vdwg.mxu0
    %v1309 = vadd.f32 %v1203, %v1298
    %v1310 = vadd.f32 %v1204, %v1301
    %v1311 = vadd.f32 %v1205, %v1304
    %v1312 = vadd.f32 %v1206, %v1307
    %v1313 = vsel %vm729, %v1309, 0.0
    %1314 = vadd.xlane.f32.xlu0 %v1313
    %v1315 = vpop.xlane.xlu0 %1314
    %v1316 = vsel %vm729, %v1310, 0.0
    %1317 = vadd.xlane.f32.xlu0 %v1316
    %v1318 = vpop.xlane.xlu0 %1317
    %v1319 = vsel %vm729, %v1311, 0.0
    %1320 = vadd.xlane.f32.xlu0 %v1319
    %v1321 = vpop.xlane.xlu0 %1320
    %v1322 = vsel %vm729, %v1312, 0.0
    %1323 = vadd.xlane.f32.xlu0 %v1322
    %v1324 = vpop.xlane.xlu0 %1323
    %v1325 = vmul.f32 %v1315, %v1114
    %v1326 = vmul.f32 %v1318, %v1114
    %v1327 = vmul.f32 %v1321, %v1114
    %v1328 = vmul.f32 %v1324, %v1114
    %v1329 = vsub.f32 %v1309, %v1325
    %v1330 = vsub.f32 %v1310, %v1326
    %v1331 = vsub.f32 %v1311, %v1327
    %v1332 = vsub.f32 %v1312, %v1328
    %v1333 = vmul.f32 %v1329, %v1329
    %v1334 = vmul.f32 %v1330, %v1330
    %v1335 = vmul.f32 %v1331, %v1331
    %v1336 = vmul.f32 %v1332, %v1332
    %v1337 = vsel %vm729, %v1333, 0.0
    %1338 = vadd.xlane.f32.xlu0 %v1337
    %v1339 = vpop.xlane.xlu0 %1338
    %v1340 = vsel %vm729, %v1334, 0.0
    %1341 = vadd.xlane.f32.xlu0 %v1340
    %v1342 = vpop.xlane.xlu0 %1341
    %v1343 = vsel %vm729, %v1335, 0.0
    %1344 = vadd.xlane.f32.xlu0 %v1343
    %v1345 = vpop.xlane.xlu0 %1344
    %v1346 = vsel %vm729, %v1336, 0.0
    %1347 = vadd.xlane.f32.xlu0 %v1346
    %v1348 = vpop.xlane.xlu0 %1347
    %v1349 = vmul.f32 %v1339, %v1114
    %v1350 = vmul.f32 %v1342, %v1114
    %v1351 = vmul.f32 %v1345, %v1114
    %v1352 = vmul.f32 %v1348, %v1114
    %v1353 = vadd.f32 %v1349, 1e-05
    %v1354 = vadd.f32 %v1350, 1e-05
    %v1355 = vadd.f32 %v1351, 1e-05
    %v1356 = vadd.f32 %v1352, 1e-05
    %v1357 = vrsqrt.pop %v1353
    %v1358 = vmul.f32 %v1357, %v1353
    %v1359 = vmul.f32 %v1358, %v1357
    %v1360 = vmul.f32 0.5, %v1359
    %v1361 = vsub.f32 1.5, %v1360
    %v1362 = vmul.f32 %v1357, %v1361
    %vm1363 = vweird.f32 %v1353
    %vm1364 = vweird.f32 %v1357
    %vm1365 = vmor %vm1363, %vm1364
    %v1366 = vsel %vm1365, %v1357, %v1362
    %v1367 = vrsqrt.pop %v1354
    %v1368 = vmul.f32 %v1367, %v1354
    %v1369 = vmul.f32 %v1368, %v1367
    %v1370 = vmul.f32 0.5, %v1369
    %v1371 = vsub.f32 1.5, %v1370
    %v1372 = vmul.f32 %v1367, %v1371
    %vm1373 = vweird.f32 %v1354
    %vm1374 = vweird.f32 %v1367
    %vm1375 = vmor %vm1373, %vm1374
    %v1376 = vsel %vm1375, %v1367, %v1372
    %v1377 = vrsqrt.pop %v1355
    %v1378 = vmul.f32 %v1377, %v1355
    %v1379 = vmul.f32 %v1378, %v1377
    %v1380 = vmul.f32 0.5, %v1379
    %v1381 = vsub.f32 1.5, %v1380
    %v1382 = vmul.f32 %v1377, %v1381
    %vm1383 = vweird.f32 %v1355
    %vm1384 = vweird.f32 %v1377
    %vm1385 = vmor %vm1383, %vm1384
    %v1386 = vsel %vm1385, %v1377, %v1382
    %v1387 = vrsqrt.pop %v1356
    %v1388 = vmul.f32 %v1387, %v1356
    %v1389 = vmul.f32 %v1388, %v1387
    %v1390 = vmul.f32 0.5, %v1389
    %v1391 = vsub.f32 1.5, %v1390
    %v1392 = vmul.f32 %v1387, %v1391
    %vm1393 = vweird.f32 %v1356
    %vm1394 = vweird.f32 %v1387
    %vm1395 = vmor %vm1393, %vm1394
    %v1396 = vsel %vm1395, %v1387, %v1392
    %v1397 = vmul.f32 %v1329, %v1366
    %v1398 = vmul.f32 %v1330, %v1376
    %v1399 = vmul.f32 %v1331, %v1386
    %v1400 = vmul.f32 %v1332, %v1396
    %v1401 = vld [vmem:[%s17] sm:$0x1]
    %v1403 = vperm.slane %v1401, 0
    %v1405 = vmul.f32 %v1397, %v1403
    %v1406 = vmul.f32 %v1398, %v1403
    %v1407 = vmul.f32 %v1399, %v1403
    %v1408 = vmul.f32 %v1400, %v1403
    %v1409 = vld [vmem:[%s18] sm:$0x1]
    %v1411 = vperm.slane %v1409, 0
    %v1413 = vadd.f32 %v1405, %v1411
    %v1414 = vadd.f32 %v1406, %v1411
    %v1415 = vadd.f32 %v1407, %v1411
    %v1416 = vadd.f32 %v1408, %v1411
    %v1417 = vld [vmem:[%s21] sm:$0x1]
    %v1419 = vperm.slane %v1417, 0
    %v1421 = vmul.f32 %v1413, %v1419
    %v1422 = vmul.f32 %v1414, %v1419
    %v1423 = vmul.f32 %v1415, %v1419
    %v1424 = vmul.f32 %v1416, %v1419
    %v1425 = vsel %vm729, %v1421, 0.0
    %1426 = vadd.xlane.f32.xlu0 %v1425
    %v1427 = vpop.xlane.xlu0 %1426
    %v1428 = vsel %vm729, %v1422, 0.0
    %1429 = vadd.xlane.f32.xlu0 %v1428
    %v1430 = vpop.xlane.xlu0 %1429
    %v1431 = vsel %vm729, %v1423, 0.0
    %1432 = vadd.xlane.f32.xlu0 %v1431
    %v1433 = vpop.xlane.xlu0 %1432
    %v1434 = vsel %vm729, %v1424, 0.0
    %1435 = vadd.xlane.f32.xlu0 %v1434
    %v1436 = vpop.xlane.xlu0 %1435
    %v1437 = vld [vmem:[#allocation2] sm:$0x1]
    %v1439 = vperm.slane %v1437, 0
    %v1441 = vadd.f32 %v1427, %v1439
    %v1442 = vadd.f32 %v1430, %v1439
    %v1443 = vadd.f32 %v1433, %v1439
    %v1444 = vadd.f32 %v1436, %v1439
    %v1445 = vld [vmem:[%s24] sm:$0x3]
    %v1446 = vld [vmem:[%s23] sm:$0xff]
    %v1447 = vld [vmem:[%s23 + $0x8] sm:$0xff]
    %v1448 = vld [vmem:[%s23 + $0x10] sm:$0xff]
    %v1449 = vld [vmem:[%s23 + $0x18] sm:$0xff]
    %1451 = vset.pattern.permute.xlu0 0
    %1452 = vperm.xlu0 %1451, %v1441
    %v1453 = vpop.permute.xlu0 %1452
    %1456 = vset.pattern.permute.xlu0 0
    %1457 = vperm.xlu0 %1456, %v1442
    %v1458 = vpop.permute.xlu0 %1457
    %1461 = vset.pattern.permute.xlu0 0
    %1462 = vperm.xlu0 %1461, %v1443
    %v1463 = vpop.permute.xlu0 %1462
    %1466 = vset.pattern.permute.xlu0 0
    %1467 = vperm.xlu0 %1466, %v1444
    %v1468 = vpop.permute.xlu0 %1467
    %v1470 = vmul.f32 %v1453, %v1446
    %v1471 = vmul.f32 %v1458, %v1447
    %v1472 = vmul.f32 %v1463, %v1448
    %v1473 = vmul.f32 %v1468, %v1449
    %v1474 = vld [vmem:[%s25] sm:$0x1]
    %v1476 = vperm.slane %v1474, 0
    %v1479 = vsel %vm729, %v1445, 0
    %1481 = vmatpush.msra.mxu0 0.0
    %1482 = vmatpush.msra.mxu0 0.0
    %1483 = vmatpush.msra.mxu0 0.0
    %1484 = vmatpush.msra.mxu0 0.0
    %1485 = vmatpush.msra.mxu0 0.0
    %1486 = vmatpush.msra.mxu0 0.0
    %1487 = vmatpush.msra.mxu0 0.0
    %1488 = vmatpush.msra.mxu0 0.0
    %1489 = vmatpush.msra.mxu0 0.0
    %1490 = vmatpush.msra.mxu0 0.0
    %1491 = vmatpush.msra.mxu0 0.0
    %1492 = vmatpush.msra.mxu0 0.0
    %1493 = vmatpush.msra.mxu0 %v1473
    %1494 = vmatpush.msra.mxu0 %v1472
    %1495 = vmatpush.msra.mxu0 %v1471
    %1496 = vmatpush.msra.mxu0 %v1470
    %1497 = vmatmul.f32.gmra.mxu0 %v1479
    %v1498 = vpop.f32.mrf.mxu0
    %v1499 = vadd.f32 %v1476, %v1498
    %1500 = vdwg.mxu0
    %vm1501 = vcmask 9216
    %v1502 = vsel %vm1501, %v1499, -inf
    %1503 = vmax.xlane.f32.xlu0 %v1502
    %v1504 = vpop.xlane.xlu0 %1503
    %v1505 = vsub.f32 %v1499, %v1504
    %v1506 = vmul.f32 %v1505, 1.442695
    %v1507 = vpow.pop %v1506
    %v1508 = vsel %vm1501, %v1507, 0.0
    %1509 = vadd.xlane.f32.xlu0 %v1508
    %v1510 = vpop.xlane.xlu0 %1509
    %v1511 = vlog2.pop %v1510
    %v1512 = vmul.f32 %v1511, 0.6931472
    %v1513 = vsub.f32 %v1505, %v1512
    %1514 = vst.msk [vmem:[#allocation3] sm:$0x3] %vm1501, %v1513
    // Predicated region
    $region106: #{tfeq_forward.1} parent=1 // pred_check
      _
    $region107: #{tfeq_forward.1} parent=1 // pred_check_branch
      %1516 = sbr.rel (0) target = $region109
    $region108: #{tfeq_forward.1} parent=1 // pred_region
      %1518 = vsyncadd [#allocation4], 0
      %s1520 = sshll.u32 [#allocation3], 4
      %s1521 = int_to_ptr.vmem [resolvable:$true] %s1520
      %s1522 = sshll.u32 %s26, 4
      %s1523 = int_to_ptr.hbm [resolvable:$true] %s1522
      %1525 = dma.vmem_to_hbm [thread:$0]  %s1521, 32, %s1523, [#allocation4]
    $region109: #{tfeq_forward.1} parent=1 // pred_fallthru
      _
    // Predicated region
    $region110: #{tfeq_forward.1} parent=1 // pred_check
      _
    $region111: #{tfeq_forward.1} parent=1 // pred_check_branch
      %1527 = sbr.rel (0) target = $region113
    $region112: #{tfeq_forward.1} parent=1 // pred_region
      %1529 = dma.done [#allocation4], 32
    $region113: #{tfeq_forward.1} parent=1 // pred_fallthru
      _
    %1530 = vsyncpa [#allocation4], 1

</llo_original>
